<compile_context>
chip_gen: v7x
topology: tpu7x:2x2x1
jax: 0.10.0
libtpu: 0.0.40
codegen_flags: <defaults>
</compile_context>

<pallas_src>
import functools

import jax
import jax.numpy as jnp
from jax.experimental import pallas as pl
from jax.experimental.pallas import tpu as pltpu

LANE = 128


def lstm_fc_kernel(T, B, H, HP,
                   x_ref,      # (T*B, I)    time-major, flattened inputs
                   wih_ref,    # (I, 4*HP)   W_ih^T, gate blocks lane-padded
                   whh_ref,    # (H, 4*HP)   W_hh^T, gate blocks lane-padded
                   b_ref,      # (1, 4*HP)   bias_ih + bias_hh, lane-padded
                   wfc_ref,    # (H, OP)     W_fc^T, output lane-padded
                   bfc_ref,    # (1, OP)     fc bias, lane-padded
                   out_ref,    # (B, OP)     padded prediction
                   xp_ref):    # (T*B, 4*HP) VMEM scratch: precomputed input proj
    # --- (1) hoisted input projection for ALL timesteps: one big MXU matmul,
    #     bias folded in, stored to VMEM scratch. Off the serial critical path.
    xp_ref[...] = (jnp.dot(x_ref[...], wih_ref[...],
                           preferred_element_type=jnp.float32)
                   + b_ref[...])

    whh = whh_ref[...]                                   # (H, 4*HP), small

    # --- (2)+(3) recurrence: h/c live in vregs; loop fully unrolled (static T).
    h = jnp.zeros((B, H), jnp.float32)
    c = jnp.zeros((B, H), jnp.float32)
    for t in range(T):                                   # static -> full unroll
        gates = (xp_ref[pl.ds(t * B, B), :]              # (B, 4*HP)
                 + jnp.dot(h, whh, preferred_element_type=jnp.float32))
        # --- (4) each gate block starts on a 128-lane vreg boundary and is
        #     consumed at lane offset 0 -> no lane rotations / masked selects.
        i_g = jax.nn.sigmoid(gates[:, 0 * HP:0 * HP + H])
        f_g = jax.nn.sigmoid(gates[:, 1 * HP:1 * HP + H])
        g_g = jnp.tanh(gates[:, 2 * HP:2 * HP + H])
        o_g = jax.nn.sigmoid(gates[:, 3 * HP:3 * HP + H])
        c = f_g * c + i_g * g_g
        h = o_g * jnp.tanh(c)

    # --- FC head on the last timestep's hidden state; 128-lane-dense store.
    out_ref[...] = (jnp.dot(h, wfc_ref[...], preferred_element_type=jnp.float32)
                    + bfc_ref[...]).astype(out_ref.dtype)


def prepare_params(params):
    """One-time layout prep (transpose + per-gate 128-lane padding). Cache this."""
    w_ih, w_hh = params["w_ih"], params["w_hh"]          # (4H, I), (4H, H)
    w_fc, b_fc = params["w_fc"], params["b_fc"]          # (O, H), (O,)
    four_h = w_ih.shape[0]
    H = four_h // 4
    O = w_fc.shape[0]
    HP = max(LANE, ((H + LANE - 1) // LANE) * LANE)      # per-gate lane width
    OP = max(LANE, ((O + LANE - 1) // LANE) * LANE)      # padded output width

    def pad_gate_cols(w_t):                              # (rows, 4H) -> (rows, 4*HP)
        rows = w_t.shape[0]
        out = jnp.zeros((rows, 4 * HP), jnp.float32)
        for g in range(4):                               # PyTorch gate order i,f,g,o
            out = out.at[:, g * HP:g * HP + H].set(w_t[:, g * H:(g + 1) * H])
        return out

    wih_p = pad_gate_cols(jnp.transpose(w_ih, (1, 0)))                   # (I, 4*HP)
    whh_p = pad_gate_cols(jnp.transpose(w_hh, (1, 0)))                   # (H, 4*HP)
    b_p = pad_gate_cols((params["b_ih"] + params["b_hh"])[None, :])      # (1, 4*HP)
    wfc_p = jnp.zeros((H, OP), jnp.float32).at[:, :O].set(
        jnp.transpose(w_fc, (1, 0)))                                     # (H, OP)
    bfc_p = jnp.zeros((1, OP), jnp.float32).at[0, :O].set(b_fc)          # (1, OP)

    return {"wih": wih_p, "whh": whh_p, "b": b_p, "wfc": wfc_p, "bfc": bfc_p,
            "H": H, "HP": HP, "O": O, "OP": OP}


def lstm_simple_forward(x, prep):
    """x: (B, T, input_size) float32 (PyTorch batch_first). prep: prepare_params()."""
    B, T, I = x.shape
    H, HP, O, OP = prep["H"], prep["HP"], prep["O"], prep["OP"]

    # Time-major, flattened view so the kernel's hoisted projection is one matmul.
    x_2d = jnp.transpose(x, (1, 0, 2)).reshape(T * B, I)

    kernel = functools.partial(lstm_fc_kernel, T, B, H, HP)
    out_padded = pl.pallas_call(
        kernel,
        out_shape=jax.ShapeDtypeStruct((B, OP), jnp.float32),
        in_specs=[pl.BlockSpec(memory_space=pltpu.MemorySpace.VMEM)] * 6,
        out_specs=pl.BlockSpec(memory_space=pltpu.MemorySpace.VMEM),
        scratch_shapes=[pltpu.VMEM((T * B, 4 * HP), jnp.float32)],
    )(x_2d, prep["wih"], prep["whh"], prep["b"], prep["wfc"], prep["bfc"])

    return out_padded[:, :O]


def lstm_simple_reference(x, params):
    """Pure-JAX reference matching nn.LSTM(batch_first=True) + nn.Linear."""
    B, T, I = x.shape
    H = params["w_hh"].shape[1]
    wih_t = jnp.transpose(params["w_ih"], (1, 0))
    whh_t = jnp.transpose(params["w_hh"], (1, 0))
    b = params["b_ih"] + params["b_hh"]
    h = jnp.zeros((B, H), jnp.float32)
    c = jnp.zeros((B, H), jnp.float32)
    for t in range(T):
        gates = x[:, t, :] @ wih_t + h @ whh_t + b
        i_g = jax.nn.sigmoid(gates[:, 0 * H:1 * H])
        f_g = jax.nn.sigmoid(gates[:, 1 * H:2 * H])
        g_g = jnp.tanh(gates[:, 2 * H:3 * H])
        o_g = jax.nn.sigmoid(gates[:, 3 * H:4 * H])
        c = f_g * c + i_g * g_g
        h = o_g * jnp.tanh(c)
    return h @ jnp.transpose(params["w_fc"], (1, 0)) + params["b_fc"]


def init_params(key, input_size, hidden_size, output_size):
    """Deterministic synthetic parameters (PyTorch-style uniform(-1/sqrt(H), 1/sqrt(H)))."""
    k = 1.0 / jnp.sqrt(hidden_size)
    keys = jax.random.split(key, 6)
    u = lambda kk, shape: jax.random.uniform(kk, shape, jnp.float32, -k, k)
    return {
        "w_ih": u(keys[0], (4 * hidden_size, input_size)),
        "w_hh": u(keys[1], (4 * hidden_size, hidden_size)),
        "b_ih": u(keys[2], (4 * hidden_size,)),
        "b_hh": u(keys[3], (4 * hidden_size,)),
        "w_fc": u(keys[4], (output_size, hidden_size)),
        "b_fc": u(keys[5], (output_size,)),
    }


if __name__ == "__main__":
    B, T, INPUT, HIDDEN, OUTPUT = 2, 8, 16, 32, 4

    key = jax.random.PRNGKey(0)
    kx, kp = jax.random.split(key)
    x = jax.random.normal(kx, (B, T, INPUT), jnp.float32)
    params = init_params(kp, INPUT, HIDDEN, OUTPUT)

    prep = prepare_params(params)              # one-time weight layout prep
    out = lstm_simple_forward(x, prep)
    out = jax.block_until_ready(out)
    assert out.shape == (B, OUTPUT)

    ref = lstm_simple_reference(x, params)
    err = float(jnp.max(jnp.abs(out - ref)))
    assert err < 2e-3, f"mismatch vs pure-JAX reference: max abs err = {err}"

    print("KERNEL_OK")
</pallas_src>

<mosaic_0001>
module attributes {stable_mosaic.version = 11 : i64} {
  func.func @lstm_fc_kernel(%arg0: memref<16x16xf32, #tpu.memory_space<vmem>>, %arg1: memref<16x512xf32, #tpu.memory_space<vmem>>, %arg2: memref<32x512xf32, #tpu.memory_space<vmem>>, %arg3: memref<1x512xf32, #tpu.memory_space<vmem>>, %arg4: memref<32x128xf32, #tpu.memory_space<vmem>>, %arg5: memref<1x128xf32, #tpu.memory_space<vmem>>, %arg6: memref<2x128xf32, #tpu.memory_space<vmem>>, %arg7: memref<16x512xf32, #tpu.memory_space<vmem>>) attributes {dimension_semantics = [], scalar_prefetch = 0 : i64, scratch_operands = 1 : i64, tpu.core_type = #tpu.core_type<tc>} {
    %c0 = arith.constant 0 : index
    %c0_0 = arith.constant 0 : index
    %0 = vector.load %arg0[%c0, %c0_0] : memref<16x16xf32, #tpu.memory_space<vmem>>, vector<16x16xf32>
    %c0_1 = arith.constant 0 : index
    %c0_2 = arith.constant 0 : index
    %1 = vector.load %arg1[%c0_1, %c0_2] : memref<16x512xf32, #tpu.memory_space<vmem>>, vector<16x512xf32>
    %cst = arith.constant dense<0.000000e+00> : vector<16x512xf32>
    %2 = tpu.matmul %0, %1, %cst {dimension_numbers = #tpu.dot_dimension_numbers<[1], [0], [0], [1], [0, 0, 1, 1], [], []>} : vector<16x16xf32>, vector<16x512xf32>, vector<16x512xf32> -> vector<16x512xf32>
    %c0_3 = arith.constant 0 : index
    %c0_4 = arith.constant 0 : index
    %3 = vector.load %arg3[%c0_3, %c0_4] : memref<1x512xf32, #tpu.memory_space<vmem>>, vector<1x512xf32>
    %4 = vector.broadcast %3 : vector<1x512xf32> to vector<16x512xf32>
    %5 = arith.addf %2, %4 : vector<16x512xf32>
    %c0_5 = arith.constant 0 : index
    %c0_6 = arith.constant 0 : index
    %6 = vector.load %arg7[%c0_5, %c0_6] : memref<16x512xf32, #tpu.memory_space<vmem>>, vector<16x512xf32>
    tpu.vector_store %arg7[%c0_5, %c0_6], %5 {strides = array<i32>} : memref<16x512xf32, #tpu.memory_space<vmem>>, vector<16x512xf32>,
    %c0_7 = arith.constant 0 : index
    %c0_8 = arith.constant 0 : index
    %7 = vector.load %arg2[%c0_7, %c0_8] : memref<32x512xf32, #tpu.memory_space<vmem>>, vector<32x512xf32>
    %cst_9 = arith.constant 0.000000e+00 : f32
    %8 = vector.broadcast %cst_9 : f32 to vector<2x32xf32>
    %cst_10 = arith.constant 0.000000e+00 : f32
    %9 = vector.broadcast %cst_10 : f32 to vector<2x32xf32>
    %c0_11 = arith.constant 0 : index
    %c0_12 = arith.constant 0 : index
    %10 = vector.load %arg7[%c0_11, %c0_12] : memref<16x512xf32, #tpu.memory_space<vmem>>, vector<2x512xf32>
    %cst_13 = arith.constant dense<0.000000e+00> : vector<2x512xf32>
    %11 = tpu.matmul %8, %7, %cst_13 {dimension_numbers = #tpu.dot_dimension_numbers<[1], [0], [0], [1], [0, 0, 1, 1], [], []>} : vector<2x32xf32>, vector<32x512xf32>, vector<2x512xf32> -> vector<2x512xf32>
    %12 = arith.addf %10, %11 : vector<2x512xf32>
    %13 = vector.extract_strided_slice %12 {offsets = [0, 0], sizes = [2, 32], strides = [1, 1]} : vector<2x512xf32> to vector<2x32xf32>
    %14 = arith.negf %13 : vector<2x32xf32>
    %15 = math.exp %14 : vector<2x32xf32>
    %cst_14 = arith.constant 1.000000e+00 : f32
    %16 = vector.broadcast %cst_14 : f32 to vector<2x32xf32>
    %17 = arith.addf %16, %15 : vector<2x32xf32>
    %18 = arith.divf %16, %17 : vector<2x32xf32>
    %19 = vector.extract_strided_slice %12 {offsets = [0, 128], sizes = [2, 32], strides = [1, 1]} : vector<2x512xf32> to vector<2x32xf32>
    %20 = arith.negf %19 : vector<2x32xf32>
    %21 = math.exp %20 : vector<2x32xf32>
    %cst_15 = arith.constant 1.000000e+00 : f32
    %22 = vector.broadcast %cst_15 : f32 to vector<2x32xf32>
    %23 = arith.addf %22, %21 : vector<2x32xf32>
    %24 = arith.divf %22, %23 : vector<2x32xf32>
    %25 = vector.extract_strided_slice %12 {offsets = [0, 256], sizes = [2, 32], strides = [1, 1]} : vector<2x512xf32> to vector<2x32xf32>
    %26 = math.tanh %25 : vector<2x32xf32>
    %27 = vector.extract_strided_slice %12 {offsets = [0, 384], sizes = [2, 32], strides = [1, 1]} : vector<2x512xf32> to vector<2x32xf32>
    %28 = arith.negf %27 : vector<2x32xf32>
    %29 = math.exp %28 : vector<2x32xf32>
    %cst_16 = arith.constant 1.000000e+00 : f32
    %30 = vector.broadcast %cst_16 : f32 to vector<2x32xf32>
    %31 = arith.addf %30, %29 : vector<2x32xf32>
    %32 = arith.divf %30, %31 : vector<2x32xf32>
    %33 = arith.mulf %24, %9 : vector<2x32xf32>
    %34 = arith.mulf %18, %26 : vector<2x32xf32>
    %35 = arith.addf %33, %34 : vector<2x32xf32>
    %36 = math.tanh %35 : vector<2x32xf32>
    %37 = arith.mulf %32, %36 : vector<2x32xf32>
    %c2 = arith.constant 2 : index
    %c0_17 = arith.constant 0 : index
    %38 = vector.load %arg7[%c2, %c0_17] : memref<16x512xf32, #tpu.memory_space<vmem>>, vector<2x512xf32>
    %cst_18 = arith.constant dense<0.000000e+00> : vector<2x512xf32>
    %39 = tpu.matmul %37, %7, %cst_18 {dimension_numbers = #tpu.dot_dimension_numbers<[1], [0], [0], [1], [0, 0, 1, 1], [], []>} : vector<2x32xf32>, vector<32x512xf32>, vector<2x512xf32> -> vector<2x512xf32>
    %40 = arith.addf %38, %39 : vector<2x512xf32>
    %41 = vector.extract_strided_slice %40 {offsets = [0, 0], sizes = [2, 32], strides = [1, 1]} : vector<2x512xf32> to vector<2x32xf32>
    %42 = arith.negf %41 : vector<2x32xf32>
    %43 = math.exp %42 : vector<2x32xf32>
    %cst_19 = arith.constant 1.000000e+00 : f32
    %44 = vector.broadcast %cst_19 : f32 to vector<2x32xf32>
    %45 = arith.addf %44, %43 : vector<2x32xf32>
    %46 = arith.divf %44, %45 : vector<2x32xf32>
    %47 = vector.extract_strided_slice %40 {offsets = [0, 128], sizes = [2, 32], strides = [1, 1]} : vector<2x512xf32> to vector<2x32xf32>
    %48 = arith.negf %47 : vector<2x32xf32>
    %49 = math.exp %48 : vector<2x32xf32>
    %cst_20 = arith.constant 1.000000e+00 : f32
    %50 = vector.broadcast %cst_20 : f32 to vector<2x32xf32>
    %51 = arith.addf %50, %49 : vector<2x32xf32>
    %52 = arith.divf %50, %51 : vector<2x32xf32>
    %53 = vector.extract_strided_slice %40 {offsets = [0, 256], sizes = [2, 32], strides = [1, 1]} : vector<2x512xf32> to vector<2x32xf32>
    %54 = math.tanh %53 : vector<2x32xf32>
    %55 = vector.extract_strided_slice %40 {offsets = [0, 384], sizes = [2, 32], strides = [1, 1]} : vector<2x512xf32> to vector<2x32xf32>
    %56 = arith.negf %55 : vector<2x32xf32>
    %57 = math.exp %56 : vector<2x32xf32>
    %cst_21 = arith.constant 1.000000e+00 : f32
    %58 = vector.broadcast %cst_21 : f32 to vector<2x32xf32>
    %59 = arith.addf %58, %57 : vector<2x32xf32>
    %60 = arith.divf %58, %59 : vector<2x32xf32>
    %61 = arith.mulf %52, %35 : vector<2x32xf32>
    %62 = arith.mulf %46, %54 : vector<2x32xf32>
    %63 = arith.addf %61, %62 : vector<2x32xf32>
    %64 = math.tanh %63 : vector<2x32xf32>
    %65 = arith.mulf %60, %64 : vector<2x32xf32>
    %c4 = arith.constant 4 : index
    %c0_22 = arith.constant 0 : index
    %66 = vector.load %arg7[%c4, %c0_22] : memref<16x512xf32, #tpu.memory_space<vmem>>, vector<2x512xf32>
    %cst_23 = arith.constant dense<0.000000e+00> : vector<2x512xf32>
    %67 = tpu.matmul %65, %7, %cst_23 {dimension_numbers = #tpu.dot_dimension_numbers<[1], [0], [0], [1], [0, 0, 1, 1], [], []>} : vector<2x32xf32>, vector<32x512xf32>, vector<2x512xf32> -> vector<2x512xf32>
    %68 = arith.addf %66, %67 : vector<2x512xf32>
    %69 = vector.extract_strided_slice %68 {offsets = [0, 0], sizes = [2, 32], strides = [1, 1]} : vector<2x512xf32> to vector<2x32xf32>
    %70 = arith.negf %69 : vector<2x32xf32>
    %71 = math.exp %70 : vector<2x32xf32>
    %cst_24 = arith.constant 1.000000e+00 : f32
    %72 = vector.broadcast %cst_24 : f32 to vector<2x32xf32>
    %73 = arith.addf %72, %71 : vector<2x32xf32>
    %74 = arith.divf %72, %73 : vector<2x32xf32>
    %75 = vector.extract_strided_slice %68 {offsets = [0, 128], sizes = [2, 32], strides = [1, 1]} : vector<2x512xf32> to vector<2x32xf32>
    %76 = arith.negf %75 : vector<2x32xf32>
    %77 = math.exp %76 : vector<2x32xf32>
    %cst_25 = arith.constant 1.000000e+00 : f32
    %78 = vector.broadcast %cst_25 : f32 to vector<2x32xf32>
    %79 = arith.addf %78, %77 : vector<2x32xf32>
    %80 = arith.divf %78, %79 : vector<2x32xf32>
    %81 = vector.extract_strided_slice %68 {offsets = [0, 256], sizes = [2, 32], strides = [1, 1]} : vector<2x512xf32> to vector<2x32xf32>
    %82 = math.tanh %81 : vector<2x32xf32>
    %83 = vector.extract_strided_slice %68 {offsets = [0, 384], sizes = [2, 32], strides = [1, 1]} : vector<2x512xf32> to vector<2x32xf32>
    %84 = arith.negf %83 : vector<2x32xf32>
    %85 = math.exp %84 : vector<2x32xf32>
    %cst_26 = arith.constant 1.000000e+00 : f32
    %86 = vector.broadcast %cst_26 : f32 to vector<2x32xf32>
    %87 = arith.addf %86, %85 : vector<2x32xf32>
    %88 = arith.divf %86, %87 : vector<2x32xf32>
    %89 = arith.mulf %80, %63 : vector<2x32xf32>
    %90 = arith.mulf %74, %82 : vector<2x32xf32>
    %91 = arith.addf %89, %90 : vector<2x32xf32>
    %92 = math.tanh %91 : vector<2x32xf32>
    %93 = arith.mulf %88, %92 : vector<2x32xf32>
    %c6 = arith.constant 6 : index
    %c0_27 = arith.constant 0 : index
    %94 = vector.load %arg7[%c6, %c0_27] : memref<16x512xf32, #tpu.memory_space<vmem>>, vector<2x512xf32>
    %cst_28 = arith.constant dense<0.000000e+00> : vector<2x512xf32>
    %95 = tpu.matmul %93, %7, %cst_28 {dimension_numbers = #tpu.dot_dimension_numbers<[1], [0], [0], [1], [0, 0, 1, 1], [], []>} : vector<2x32xf32>, vector<32x512xf32>, vector<2x512xf32> -> vector<2x512xf32>
    %96 = arith.addf %94, %95 : vector<2x512xf32>
    %97 = vector.extract_strided_slice %96 {offsets = [0, 0], sizes = [2, 32], strides = [1, 1]} : vector<2x512xf32> to vector<2x32xf32>
    %98 = arith.negf %97 : vector<2x32xf32>
    %99 = math.exp %98 : vector<2x32xf32>
    %cst_29 = arith.constant 1.000000e+00 : f32
    %100 = vector.broadcast %cst_29 : f32 to vector<2x32xf32>
    %101 = arith.addf %100, %99 : vector<2x32xf32>
    %102 = arith.divf %100, %101 : vector<2x32xf32>
    %103 = vector.extract_strided_slice %96 {offsets = [0, 128], sizes = [2, 32], strides = [1, 1]} : vector<2x512xf32> to vector<2x32xf32>
    %104 = arith.negf %103 : vector<2x32xf32>
    %105 = math.exp %104 : vector<2x32xf32>
    %cst_30 = arith.constant 1.000000e+00 : f32
    %106 = vector.broadcast %cst_30 : f32 to vector<2x32xf32>
    %107 = arith.addf %106, %105 : vector<2x32xf32>
    %108 = arith.divf %106, %107 : vector<2x32xf32>
    %109 = vector.extract_strided_slice %96 {offsets = [0, 256], sizes = [2, 32], strides = [1, 1]} : vector<2x512xf32> to vector<2x32xf32>
    %110 = math.tanh %109 : vector<2x32xf32>
    %111 = vector.extract_strided_slice %96 {offsets = [0, 384], sizes = [2, 32], strides = [1, 1]} : vector<2x512xf32> to vector<2x32xf32>
    %112 = arith.negf %111 : vector<2x32xf32>
    %113 = math.exp %112 : vector<2x32xf32>
    %cst_31 = arith.constant 1.000000e+00 : f32
    %114 = vector.broadcast %cst_31 : f32 to vector<2x32xf32>
    %115 = arith.addf %114, %113 : vector<2x32xf32>
    %116 = arith.divf %114, %115 : vector<2x32xf32>
    %117 = arith.mulf %108, %91 : vector<2x32xf32>
    %118 = arith.mulf %102, %110 : vector<2x32xf32>
    %119 = arith.addf %117, %118 : vector<2x32xf32>
    %120 = math.tanh %119 : vector<2x32xf32>
    %121 = arith.mulf %116, %120 : vector<2x32xf32>
    %c8 = arith.constant 8 : index
    %c0_32 = arith.constant 0 : index
    %122 = vector.load %arg7[%c8, %c0_32] : memref<16x512xf32, #tpu.memory_space<vmem>>, vector<2x512xf32>
    %cst_33 = arith.constant dense<0.000000e+00> : vector<2x512xf32>
    %123 = tpu.matmul %121, %7, %cst_33 {dimension_numbers = #tpu.dot_dimension_numbers<[1], [0], [0], [1], [0, 0, 1, 1], [], []>} : vector<2x32xf32>, vector<32x512xf32>, vector<2x512xf32> -> vector<2x512xf32>
    %124 = arith.addf %122, %123 : vector<2x512xf32>
    %125 = vector.extract_strided_slice %124 {offsets = [0, 0], sizes = [2, 32], strides = [1, 1]} : vector<2x512xf32> to vector<2x32xf32>
    %126 = arith.negf %125 : vector<2x32xf32>
    %127 = math.exp %126 : vector<2x32xf32>
    %cst_34 = arith.constant 1.000000e+00 : f32
    %128 = vector.broadcast %cst_34 : f32 to vector<2x32xf32>
    %129 = arith.addf %128, %127 : vector<2x32xf32>
    %130 = arith.divf %128, %129 : vector<2x32xf32>
    %131 = vector.extract_strided_slice %124 {offsets = [0, 128], sizes = [2, 32], strides = [1, 1]} : vector<2x512xf32> to vector<2x32xf32>
    %132 = arith.negf %131 : vector<2x32xf32>
    %133 = math.exp %132 : vector<2x32xf32>
    %cst_35 = arith.constant 1.000000e+00 : f32
    %134 = vector.broadcast %cst_35 : f32 to vector<2x32xf32>
    %135 = arith.addf %134, %133 : vector<2x32xf32>
    %136 = arith.divf %134, %135 : vector<2x32xf32>
    %137 = vector.extract_strided_slice %124 {offsets = [0, 256], sizes = [2, 32], strides = [1, 1]} : vector<2x512xf32> to vector<2x32xf32>
    %138 = math.tanh %137 : vector<2x32xf32>
    %139 = vector.extract_strided_slice %124 {offsets = [0, 384], sizes = [2, 32], strides = [1, 1]} : vector<2x512xf32> to vector<2x32xf32>
    %140 = arith.negf %139 : vector<2x32xf32>
    %141 = math.exp %140 : vector<2x32xf32>
    %cst_36 = arith.constant 1.000000e+00 : f32
    %142 = vector.broadcast %cst_36 : f32 to vector<2x32xf32>
    %143 = arith.addf %142, %141 : vector<2x32xf32>
    %144 = arith.divf %142, %143 : vector<2x32xf32>
    %145 = arith.mulf %136, %119 : vector<2x32xf32>
    %146 = arith.mulf %130, %138 : vector<2x32xf32>
    %147 = arith.addf %145, %146 : vector<2x32xf32>
    %148 = math.tanh %147 : vector<2x32xf32>
    %149 = arith.mulf %144, %148 : vector<2x32xf32>
    %c10 = arith.constant 10 : index
    %c0_37 = arith.constant 0 : index
    %150 = vector.load %arg7[%c10, %c0_37] : memref<16x512xf32, #tpu.memory_space<vmem>>, vector<2x512xf32>
    %cst_38 = arith.constant dense<0.000000e+00> : vector<2x512xf32>
    %151 = tpu.matmul %149, %7, %cst_38 {dimension_numbers = #tpu.dot_dimension_numbers<[1], [0], [0], [1], [0, 0, 1, 1], [], []>} : vector<2x32xf32>, vector<32x512xf32>, vector<2x512xf32> -> vector<2x512xf32>
    %152 = arith.addf %150, %151 : vector<2x512xf32>
    %153 = vector.extract_strided_slice %152 {offsets = [0, 0], sizes = [2, 32], strides = [1, 1]} : vector<2x512xf32> to vector<2x32xf32>
    %154 = arith.negf %153 : vector<2x32xf32>
    %155 = math.exp %154 : vector<2x32xf32>
    %cst_39 = arith.constant 1.000000e+00 : f32
    %156 = vector.broadcast %cst_39 : f32 to vector<2x32xf32>
    %157 = arith.addf %156, %155 : vector<2x32xf32>
    %158 = arith.divf %156, %157 : vector<2x32xf32>
    %159 = vector.extract_strided_slice %152 {offsets = [0, 128], sizes = [2, 32], strides = [1, 1]} : vector<2x512xf32> to vector<2x32xf32>
    %160 = arith.negf %159 : vector<2x32xf32>
    %161 = math.exp %160 : vector<2x32xf32>
    %cst_40 = arith.constant 1.000000e+00 : f32
    %162 = vector.broadcast %cst_40 : f32 to vector<2x32xf32>
    %163 = arith.addf %162, %161 : vector<2x32xf32>
    %164 = arith.divf %162, %163 : vector<2x32xf32>
    %165 = vector.extract_strided_slice %152 {offsets = [0, 256], sizes = [2, 32], strides = [1, 1]} : vector<2x512xf32> to vector<2x32xf32>
    %166 = math.tanh %165 : vector<2x32xf32>
    %167 = vector.extract_strided_slice %152 {offsets = [0, 384], sizes = [2, 32], strides = [1, 1]} : vector<2x512xf32> to vector<2x32xf32>
    %168 = arith.negf %167 : vector<2x32xf32>
    %169 = math.exp %168 : vector<2x32xf32>
    %cst_41 = arith.constant 1.000000e+00 : f32
    %170 = vector.broadcast %cst_41 : f32 to vector<2x32xf32>
    %171 = arith.addf %170, %169 : vector<2x32xf32>
    %172 = arith.divf %170, %171 : vector<2x32xf32>
    %173 = arith.mulf %164, %147 : vector<2x32xf32>
    %174 = arith.mulf %158, %166 : vector<2x32xf32>
    %175 = arith.addf %173, %174 : vector<2x32xf32>
    %176 = math.tanh %175 : vector<2x32xf32>
    %177 = arith.mulf %172, %176 : vector<2x32xf32>
    %c12 = arith.constant 12 : index
    %c0_42 = arith.constant 0 : index
    %178 = vector.load %arg7[%c12, %c0_42] : memref<16x512xf32, #tpu.memory_space<vmem>>, vector<2x512xf32>
    %cst_43 = arith.constant dense<0.000000e+00> : vector<2x512xf32>
    %179 = tpu.matmul %177, %7, %cst_43 {dimension_numbers = #tpu.dot_dimension_numbers<[1], [0], [0], [1], [0, 0, 1, 1], [], []>} : vector<2x32xf32>, vector<32x512xf32>, vector<2x512xf32> -> vector<2x512xf32>
    %180 = arith.addf %178, %179 : vector<2x512xf32>
    %181 = vector.extract_strided_slice %180 {offsets = [0, 0], sizes = [2, 32], strides = [1, 1]} : vector<2x512xf32> to vector<2x32xf32>
    %182 = arith.negf %181 : vector<2x32xf32>
    %183 = math.exp %182 : vector<2x32xf32>
    %cst_44 = arith.constant 1.000000e+00 : f32
    %184 = vector.broadcast %cst_44 : f32 to vector<2x32xf32>
    %185 = arith.addf %184, %183 : vector<2x32xf32>
    %186 = arith.divf %184, %185 : vector<2x32xf32>
    %187 = vector.extract_strided_slice %180 {offsets = [0, 128], sizes = [2, 32], strides = [1, 1]} : vector<2x512xf32> to vector<2x32xf32>
    %188 = arith.negf %187 : vector<2x32xf32>
    %189 = math.exp %188 : vector<2x32xf32>
    %cst_45 = arith.constant 1.000000e+00 : f32
    %190 = vector.broadcast %cst_45 : f32 to vector<2x32xf32>
    %191 = arith.addf %190, %189 : vector<2x32xf32>
    %192 = arith.divf %190, %191 : vector<2x32xf32>
    %193 = vector.extract_strided_slice %180 {offsets = [0, 256], sizes = [2, 32], strides = [1, 1]} : vector<2x512xf32> to vector<2x32xf32>
    %194 = math.tanh %193 : vector<2x32xf32>
    %195 = vector.extract_strided_slice %180 {offsets = [0, 384], sizes = [2, 32], strides = [1, 1]} : vector<2x512xf32> to vector<2x32xf32>
    %196 = arith.negf %195 : vector<2x32xf32>
    %197 = math.exp %196 : vector<2x32xf32>
    %cst_46 = arith.constant 1.000000e+00 : f32
    %198 = vector.broadcast %cst_46 : f32 to vector<2x32xf32>
    %199 = arith.addf %198, %197 : vector<2x32xf32>
    %200 = arith.divf %198, %199 : vector<2x32xf32>
    %201 = arith.mulf %192, %175 : vector<2x32xf32>
    %202 = arith.mulf %186, %194 : vector<2x32xf32>
    %203 = arith.addf %201, %202 : vector<2x32xf32>
    %204 = math.tanh %203 : vector<2x32xf32>
    %205 = arith.mulf %200, %204 : vector<2x32xf32>
    %c14 = arith.constant 14 : index
    %c0_47 = arith.constant 0 : index
    %206 = vector.load %arg7[%c14, %c0_47] : memref<16x512xf32, #tpu.memory_space<vmem>>, vector<2x512xf32>
    %cst_48 = arith.constant dense<0.000000e+00> : vector<2x512xf32>
    %207 = tpu.matmul %205, %7, %cst_48 {dimension_numbers = #tpu.dot_dimension_numbers<[1], [0], [0], [1], [0, 0, 1, 1], [], []>} : vector<2x32xf32>, vector<32x512xf32>, vector<2x512xf32> -> vector<2x512xf32>
    %208 = arith.addf %206, %207 : vector<2x512xf32>
    %209 = vector.extract_strided_slice %208 {offsets = [0, 0], sizes = [2, 32], strides = [1, 1]} : vector<2x512xf32> to vector<2x32xf32>
    %210 = arith.negf %209 : vector<2x32xf32>
    %211 = math.exp %210 : vector<2x32xf32>
    %cst_49 = arith.constant 1.000000e+00 : f32
    %212 = vector.broadcast %cst_49 : f32 to vector<2x32xf32>
    %213 = arith.addf %212, %211 : vector<2x32xf32>
    %214 = arith.divf %212, %213 : vector<2x32xf32>
    %215 = vector.extract_strided_slice %208 {offsets = [0, 128], sizes = [2, 32], strides = [1, 1]} : vector<2x512xf32> to vector<2x32xf32>
    %216 = arith.negf %215 : vector<2x32xf32>
    %217 = math.exp %216 : vector<2x32xf32>
    %cst_50 = arith.constant 1.000000e+00 : f32
    %218 = vector.broadcast %cst_50 : f32 to vector<2x32xf32>
    %219 = arith.addf %218, %217 : vector<2x32xf32>
    %220 = arith.divf %218, %219 : vector<2x32xf32>
    %221 = vector.extract_strided_slice %208 {offsets = [0, 256], sizes = [2, 32], strides = [1, 1]} : vector<2x512xf32> to vector<2x32xf32>
    %222 = math.tanh %221 : vector<2x32xf32>
    %223 = vector.extract_strided_slice %208 {offsets = [0, 384], sizes = [2, 32], strides = [1, 1]} : vector<2x512xf32> to vector<2x32xf32>
    %224 = arith.negf %223 : vector<2x32xf32>
    %225 = math.exp %224 : vector<2x32xf32>
    %cst_51 = arith.constant 1.000000e+00 : f32
    %226 = vector.broadcast %cst_51 : f32 to vector<2x32xf32>
    %227 = arith.addf %226, %225 : vector<2x32xf32>
    %228 = arith.divf %226, %227 : vector<2x32xf32>
    %229 = arith.mulf %220, %203 : vector<2x32xf32>
    %230 = arith.mulf %214, %222 : vector<2x32xf32>
    %231 = arith.addf %229, %230 : vector<2x32xf32>
    %232 = math.tanh %231 : vector<2x32xf32>
    %233 = arith.mulf %228, %232 : vector<2x32xf32>
    %c0_52 = arith.constant 0 : index
    %c0_53 = arith.constant 0 : index
    %234 = vector.load %arg4[%c0_52, %c0_53] : memref<32x128xf32, #tpu.memory_space<vmem>>, vector<32x128xf32>
    %cst_54 = arith.constant dense<0.000000e+00> : vector<2x128xf32>
    %235 = tpu.matmul %233, %234, %cst_54 {dimension_numbers = #tpu.dot_dimension_numbers<[1], [0], [0], [1], [0, 0, 1, 1], [], []>} : vector<2x32xf32>, vector<32x128xf32>, vector<2x128xf32> -> vector<2x128xf32>
    %c0_55 = arith.constant 0 : index
    %c0_56 = arith.constant 0 : index
    %236 = vector.load %arg5[%c0_55, %c0_56] : memref<1x128xf32, #tpu.memory_space<vmem>>, vector<1x128xf32>
    %237 = vector.broadcast %236 : vector<1x128xf32> to vector<2x128xf32>
    %238 = arith.addf %235, %237 : vector<2x128xf32>
    %c0_57 = arith.constant 0 : index
    %c0_58 = arith.constant 0 : index
    %239 = vector.load %arg6[%c0_57, %c0_58] : memref<2x128xf32, #tpu.memory_space<vmem>>, vector<2x128xf32>
    tpu.vector_store %arg6[%c0_57, %c0_58], %238 {strides = array<i32>} : memref<2x128xf32, #tpu.memory_space<vmem>>, vector<2x128xf32>,
    return
  }
}

</mosaic_0001>

<llo_original>
// kernel: tpu_custom_call.1
$region0: #{tpu_custom_call.1}
  #allocation0 [shape = 'u32[]', space=smem, size = 0x4, offset = 0x4, fixed_abs, tag = 'smem constant byte address 0x4 - core index']
  #allocation1 [shape = 'u32[144,128]{1,0:T(1,128)}', space=vmem, size = 0x12000, scoped, tag = 'internal scratch']
  #allocation2 [shape = 'f32[16,512]{1,0:T(8,128)}', space=vmem, size = 0x8000, scoped, tag = 'scratch operand']
  %s0 = inlined_call_operand.hbm [shape: f32[16,16], index: 0, kind: input, shape index: {}]
  %s1 = inlined_call_operand.hbm [shape: f32[16,512], index: 1, kind: input, shape index: {}]
  %s2 = inlined_call_operand.hbm [shape: f32[32,512], index: 2, kind: input, shape index: {}]
  %s3 = inlined_call_operand.vmem [shape: f32[1,512], index: 3, kind: input, shape index: {}]
  %s4 = inlined_call_operand.hbm [shape: f32[32,128], index: 4, kind: input, shape index: {}]
  %s5 = inlined_call_operand.vmem [shape: f32[1,128], index: 5, kind: input, shape index: {}]
  %s6 = inlined_call_operand.hbm [shape: f32[2,128], index: 6, kind: output, shape index: {}]
  %s7 = sld [smem:[#allocation0]]
  $region50: #{tpu_custom_call.1} parent=0
    _
  %s9 = ssub.s32 1, %s7
  %s10 = scalar_select 0, %s9, %s7
  $region1: #{tpu_custom_call.1} parent=0
    #allocation3 [shape = 'u8[8192]{0}', space=vmem, size = 0x2000, scoped, tag = 'input window, operand 0, single buffered']
    #allocation4 [shape = 's32[1]{0}', space=sflag, size = 0x4, scoped, tag = 'scoped memory for tpu_custom_call.1']
    #allocation5 [shape = 's32[1]{0}', space=sflag, size = 0x4, scoped, tag = 'scoped memory for tpu_custom_call.1']
    #allocation6 [shape = 'u8[32768]{0}', space=vmem, size = 0x8000, scoped, tag = 'input window, operand 1, single buffered']
    #allocation7 [shape = 's32[1]{0}', space=sflag, size = 0x4, scoped, tag = 'scoped memory for tpu_custom_call.1']
    #allocation8 [shape = 'u8[65536]{0}', space=vmem, size = 0x10000, scoped, tag = 'input window, operand 2, single buffered']
    #allocation9 [shape = 'u8[16384]{0}', space=vmem, size = 0x4000, scoped, tag = 'input window, operand 4, single buffered']
    #allocation10 [shape = 's32[1]{0}', space=sflag, size = 0x4, scoped, tag = 'scoped memory for tpu_custom_call.1']
    #allocation11 [shape = 'u8[1024]{0}', space=vmem, size = 0x400, scoped, tag = 'output window, operand 0, single buffered']
    %11 = vsyncpa [#allocation4], 0
    %12 = vsyncpa [#allocation7], 0
    %13 = vsyncpa [#allocation10], 0
    %14 = vsyncpa [#allocation5], 0
    // Predicated region
    $region2: #{tpu_custom_call.1} parent=1 // pred_check
      _
    $region3: #{tpu_custom_call.1} parent=1 // pred_check_branch
      %16 = sbr.rel (0) target = $region5
    $region4: #{tpu_custom_call.1} parent=1 // pred_region
      %s18 = ssub.s32 256, 256
      %19 = vsyncadd [#allocation4], %s18
      %s20 = sshll.u32 [#allocation3], 4
      %s21 = int_to_ptr.vmem [resolvable:$true] %s20
      %26 = dma.hbm_to_vmem [thread:$0]  %s0, 256, %s21, [#allocation4], 128, 128, 8
    $region5: #{tpu_custom_call.1} parent=1 // pred_fallthru
      _
    // Predicated region
    $region6: #{tpu_custom_call.1} parent=1 // pred_check
      _
    $region7: #{tpu_custom_call.1} parent=1 // pred_check_branch
      %28 = sbr.rel (0) target = $region9
    $region8: #{tpu_custom_call.1} parent=1 // pred_region
      %s30 = ssub.s32 1024, 1024
      %31 = vsyncadd [#allocation7], %s30
      %s32 = sshll.u32 [#allocation6], 4
      %s33 = int_to_ptr.vmem [resolvable:$true] %s32
      %38 = dma.hbm_to_vmem [thread:$0]  %s1, 1024, %s33, [#allocation7], 512, 512, 32
    $region9: #{tpu_custom_call.1} parent=1 // pred_fallthru
      _
    // Predicated region
    $region10: #{tpu_custom_call.1} parent=1 // pred_check
      _
    $region11: #{tpu_custom_call.1} parent=1 // pred_check_branch
      %40 = sbr.rel (0) target = $region13
    $region12: #{tpu_custom_call.1} parent=1 // pred_region
      %s42 = ssub.s32 2048, 2048
      %43 = vsyncadd [#allocation7], %s42
      %s44 = sshll.u32 [#allocation8], 4
      %s45 = int_to_ptr.vmem [resolvable:$true] %s44
      %50 = dma.hbm_to_vmem [thread:$0]  %s2, 2048, %s45, [#allocation7], 512, 512, 32
    $region13: #{tpu_custom_call.1} parent=1 // pred_fallthru
      _
    // Predicated region
    $region14: #{tpu_custom_call.1} parent=1 // pred_check
      _
    $region15: #{tpu_custom_call.1} parent=1 // pred_check_branch
      %52 = sbr.rel (0) target = $region17
    $region16: #{tpu_custom_call.1} parent=1 // pred_region
      _
    $region17: #{tpu_custom_call.1} parent=1 // pred_fallthru
      _
    // Predicated region
    $region18: #{tpu_custom_call.1} parent=1 // pred_check
      _
    $region19: #{tpu_custom_call.1} parent=1 // pred_check_branch
      %54 = sbr.rel (0) target = $region21
    $region20: #{tpu_custom_call.1} parent=1 // pred_region
      %s56 = ssub.s32 512, 512
      %57 = vsyncadd [#allocation10], %s56
      %s58 = sshll.u32 [#allocation9], 4
      %s59 = int_to_ptr.vmem [resolvable:$true] %s58
      %64 = dma.hbm_to_vmem [thread:$0]  %s4, 512, %s59, [#allocation10], 128, 128, 8
    $region21: #{tpu_custom_call.1} parent=1 // pred_fallthru
      _
    // Predicated region
    $region22: #{tpu_custom_call.1} parent=1 // pred_check
      _
    $region23: #{tpu_custom_call.1} parent=1 // pred_check_branch
      %66 = sbr.rel (0) target = $region25
    $region24: #{tpu_custom_call.1} parent=1 // pred_region
      _
    $region25: #{tpu_custom_call.1} parent=1 // pred_fallthru
      _
    // Predicated region
    $region26: #{tpu_custom_call.1} parent=1 // pred_check
      _
    $region27: #{tpu_custom_call.1} parent=1 // pred_check_branch
      %68 = sbr.rel (0) target = $region29
    $region28: #{tpu_custom_call.1} parent=1 // pred_region
      %69 = dma.done [#allocation4], 256
    $region29: #{tpu_custom_call.1} parent=1 // pred_fallthru
      _
    // Predicated region
    $region30: #{tpu_custom_call.1} parent=1 // pred_check
      _
    $region31: #{tpu_custom_call.1} parent=1 // pred_check_branch
      %71 = sbr.rel (0) target = $region33
    $region32: #{tpu_custom_call.1} parent=1 // pred_region
      %72 = dma.done [#allocation7], 1024
    $region33: #{tpu_custom_call.1} parent=1 // pred_fallthru
      _
    // Predicated region
    $region34: #{tpu_custom_call.1} parent=1 // pred_check
      _
    $region35: #{tpu_custom_call.1} parent=1 // pred_check_branch
      %74 = sbr.rel (0) target = $region37
    $region36: #{tpu_custom_call.1} parent=1 // pred_region
      %75 = dma.done [#allocation7], 2048
    $region37: #{tpu_custom_call.1} parent=1 // pred_fallthru
      _
    // Predicated region
    $region38: #{tpu_custom_call.1} parent=1 // pred_check
      _
    $region39: #{tpu_custom_call.1} parent=1 // pred_check_branch
      %77 = sbr.rel (0) target = $region41
    $region40: #{tpu_custom_call.1} parent=1 // pred_region
      %78 = dma.done [#allocation10], 512
    $region41: #{tpu_custom_call.1} parent=1 // pred_fallthru
      _
    %v79 = vld [vmem:[#allocation3] sm:$0xff]
    %v80 = vld [vmem:[#allocation3 + $0x8] sm:$0xff]
    %v81 = vld [vmem:[#allocation6] sm:$0xff]
    %v82 = vld [vmem:[#allocation6 + $0x8] sm:$0xff]
    %v83 = vld [vmem:[#allocation6 + $0x10] sm:$0xff]
    %v84 = vld [vmem:[#allocation6 + $0x18] sm:$0xff]
    %v85 = vld [vmem:[#allocation6 + $0x20] sm:$0xff]
    %v86 = vld [vmem:[#allocation6 + $0x28] sm:$0xff]
    %v87 = vld [vmem:[#allocation6 + $0x30] sm:$0xff]
    %v88 = vld [vmem:[#allocation6 + $0x38] sm:$0xff]
    %v89 = vld [vmem:[%s3] sm:$0xf]
    %v91 = vlaneseq
    %v92 = vshrl.u32 %v91, 7
    %v93 = vsub.s32 0, %v92
    %v94 = vrot.slane %v89, %v93
    %v95 = vlaneseq
    %v96 = vshrl.u32 %v95, 7
    %v97 = vsub.s32 1, %v96
    %v98 = vrot.slane %v89, %v97
    %v99 = vlaneseq
    %v100 = vshrl.u32 %v99, 7
    %v101 = vsub.s32 2, %v100
    %v102 = vrot.slane %v89, %v101
    %v103 = vlaneseq
    %v104 = vshrl.u32 %v103, 7
    %v105 = vsub.s32 3, %v104
    %v106 = vrot.slane %v89, %v105
    %vm111 = vcmask 130048
    %v113 = vsel %vm111, %v79, 0
    %v116 = vsel %vm111, %v80, 0
    %118 = vmatprep.subr.mxu0 %v82
    %119 = vmatpush1.msra.mxu0 %v81
    %120 = vmatprep.subr.mxu0 %v86
    %121 = vmatpush1.msra.mxu0 %v85
    %122 = vmatprep.subr.mxu0 0.0
    %123 = vmatpush1.msra.mxu0 0.0
    %124 = vmatprep.subr.mxu0 0.0
    %125 = vmatpush1.msra.mxu0 0.0
    %126 = vmatprep.subr.mxu0 0.0
    %127 = vmatpush1.msra.mxu0 0.0
    %128 = vmatprep.subr.mxu0 0.0
    %129 = vmatpush1.msra.mxu0 0.0
    %130 = vmatprep.subr.mxu0 0.0
    %131 = vmatpush1.msra.mxu0 0.0
    %132 = vmatprep.subr.mxu0 0.0
    %133 = vmatpush1.msra.mxu0 0.0
    %134 = vmatprep.subr.mxu0 0.0
    %135 = vmatpush1.msra.mxu0 0.0
    %136 = vmatprep.subr.mxu0 0.0
    %137 = vmatpush1.msra.mxu0 0.0
    %138 = vmatprep.subr.mxu0 0.0
    %139 = vmatpush1.msra.mxu0 0.0
    %140 = vmatprep.subr.mxu0 0.0
    %141 = vmatpush1.msra.mxu0 0.0
    %142 = vmatprep.subr.mxu0 0.0
    %143 = vmatpush1.msra.mxu0 0.0
    %144 = vmatprep.subr.mxu0 0.0
    %145 = vmatpush1.msra.mxu0 0.0
    %146 = vmatprep.subr.mxu0 0.0
    %147 = vmatpush1.msra.mxu0 0.0
    %148 = vmatprep.subr.mxu0 0.0
    %149 = vmatpush1.msra.mxu0 0.0
    %150 = vmatprep.subr.mxu0 0.0
    %151 = vmatpush1.msra.mxu0 0.0
    %152 = vmatprep.subr.mxu0 0.0
    %153 = vmatpush1.msra.mxu0 0.0
    %154 = vmatprep.subr.mxu0 0.0
    %155 = vmatpush1.msra.mxu0 0.0
    %156 = vmatprep.subr.mxu0 0.0
    %157 = vmatpush1.msra.mxu0 0.0
    %158 = vmatprep.subr.mxu0 0.0
    %159 = vmatpush1.msra.mxu0 0.0
    %160 = vmatprep.subr.mxu0 0.0
    %161 = vmatpush1.msra.mxu0 0.0
    %162 = vmatprep.subr.mxu0 0.0
    %163 = vmatpush1.msra.mxu0 0.0
    %164 = vmatprep.subr.mxu0 0.0
    %165 = vmatpush1.msra.mxu0 0.0
    %166 = vmatprep.subr.mxu0 0.0
    %167 = vmatpush1.msra.mxu0 0.0
    %168 = vmatprep.subr.mxu0 0.0
    %169 = vmatpush1.msra.mxu0 0.0
    %170 = vmatprep.subr.mxu0 0.0
    %171 = vmatpush1.msra.mxu0 0.0
    %172 = vmatprep.subr.mxu0 0.0
    %173 = vmatpush1.msra.mxu0 0.0
    %174 = vmatprep.subr.mxu0 0.0
    %175 = vmatpush1.msra.mxu0 0.0
    %176 = vmatprep.subr.mxu0 0.0
    %177 = vmatpush1.msra.mxu0 0.0
    %178 = vmatprep.subr.mxu0 0.0
    %179 = vmatpush1.msra.mxu0 0.0
    %180 = vmatprep.subr.mxu0 0.0
    %181 = vmatpush1.msra.mxu0 0.0
    %182 = vmatprep.mubr.f32.mxu0 0.0
    %183 = vmatmul.mubr.f32.gmra.mrb[0].mxu0 %v113
    %v184 = vpop.f32.mrb[0].mxu0
    %v185 = vadd.f32 %v94, %v184
    %v186 = vpop.f32.mrb[0].mxu0
    %v187 = vadd.f32 %v98, %v186
    %188 = vmatprep.mubr.f32.mxu0 0.0
    %189 = vmatmul.mubr.f32.gmra.mrb[0].mxu0 %v116
    %v190 = vpop.f32.mrb[0].mxu0
    %v191 = vadd.f32 %v94, %v190
    %v192 = vpop.f32.mrb[0].mxu0
    %v193 = vadd.f32 %v98, %v192
    %194 = vdwg.mxu0
    %195 = vmatprep.subr.mxu0 %v84
    %196 = vmatpush1.msra.mxu0 %v83
    %197 = vmatprep.subr.mxu0 %v88
    %198 = vmatpush1.msra.mxu0 %v87
    %199 = vmatprep.subr.mxu0 0.0
    %200 = vmatpush1.msra.mxu0 0.0
    %201 = vmatprep.subr.mxu0 0.0
    %202 = vmatpush1.msra.mxu0 0.0
    %203 = vmatprep.subr.mxu0 0.0
    %204 = vmatpush1.msra.mxu0 0.0
    %205 = vmatprep.subr.mxu0 0.0
    %206 = vmatpush1.msra.mxu0 0.0
    %207 = vmatprep.subr.mxu0 0.0
    %208 = vmatpush1.msra.mxu0 0.0
    %209 = vmatprep.subr.mxu0 0.0
    %210 = vmatpush1.msra.mxu0 0.0
    %211 = vmatprep.subr.mxu0 0.0
    %212 = vmatpush1.msra.mxu0 0.0
    %213 = vmatprep.subr.mxu0 0.0
    %214 = vmatpush1.msra.mxu0 0.0
    %215 = vmatprep.subr.mxu0 0.0
    %216 = vmatpush1.msra.mxu0 0.0
    %217 = vmatprep.subr.mxu0 0.0
    %218 = vmatpush1.msra.mxu0 0.0
    %219 = vmatprep.subr.mxu0 0.0
    %220 = vmatpush1.msra.mxu0 0.0
    %221 = vmatprep.subr.mxu0 0.0
    %222 = vmatpush1.msra.mxu0 0.0
    %223 = vmatprep.subr.mxu0 0.0
    %224 = vmatpush1.msra.mxu0 0.0
    %225 = vmatprep.subr.mxu0 0.0
    %226 = vmatpush1.msra.mxu0 0.0
    %227 = vmatprep.subr.mxu0 0.0
    %228 = vmatpush1.msra.mxu0 0.0
    %229 = vmatprep.subr.mxu0 0.0
    %230 = vmatpush1.msra.mxu0 0.0
    %231 = vmatprep.subr.mxu0 0.0
    %232 = vmatpush1.msra.mxu0 0.0
    %233 = vmatprep.subr.mxu0 0.0
    %234 = vmatpush1.msra.mxu0 0.0
    %235 = vmatprep.subr.mxu0 0.0
    %236 = vmatpush1.msra.mxu0 0.0
    %237 = vmatprep.subr.mxu0 0.0
    %238 = vmatpush1.msra.mxu0 0.0
    %239 = vmatprep.subr.mxu0 0.0
    %240 = vmatpush1.msra.mxu0 0.0
    %241 = vmatprep.subr.mxu0 0.0
    %242 = vmatpush1.msra.mxu0 0.0
    %243 = vmatprep.subr.mxu0 0.0
    %244 = vmatpush1.msra.mxu0 0.0
    %245 = vmatprep.subr.mxu0 0.0
    %246 = vmatpush1.msra.mxu0 0.0
    %247 = vmatprep.subr.mxu0 0.0
    %248 = vmatpush1.msra.mxu0 0.0
    %249 = vmatprep.subr.mxu0 0.0
    %250 = vmatpush1.msra.mxu0 0.0
    %251 = vmatprep.subr.mxu0 0.0
    %252 = vmatpush1.msra.mxu0 0.0
    %253 = vmatprep.subr.mxu0 0.0
    %254 = vmatpush1.msra.mxu0 0.0
    %255 = vmatprep.subr.mxu0 0.0
    %256 = vmatpush1.msra.mxu0 0.0
    %257 = vmatprep.subr.mxu0 0.0
    %258 = vmatpush1.msra.mxu0 0.0
    %259 = vmatprep.mubr.f32.mxu0 0.0
    %260 = vmatmul.mubr.f32.gmra.mrb[0].mxu0 %v113
    %v261 = vpop.f32.mrb[0].mxu0
    %v262 = vadd.f32 %v102, %v261
    %v263 = vpop.f32.mrb[0].mxu0
    %v264 = vadd.f32 %v106, %v263
    %265 = vmatprep.mubr.f32.mxu0 0.0
    %266 = vmatmul.mubr.f32.gmra.mrb[0].mxu0 %v116
    %v267 = vpop.f32.mrb[0].mxu0
    %v268 = vadd.f32 %v102, %v267
    %v269 = vpop.f32.mrb[0].mxu0
    %v270 = vadd.f32 %v106, %v269
    %271 = vdwg.mxu0
    %272 = vst [vmem:[#allocation2] sm:$0xff] %v185
    %273 = vst [vmem:[#allocation2 + $0x8] sm:$0xff] %v187
    %274 = vst [vmem:[#allocation2 + $0x10] sm:$0xff] %v262
    %275 = vst [vmem:[#allocation2 + $0x18] sm:$0xff] %v264
    %276 = vst [vmem:[#allocation2 + $0x20] sm:$0xff] %v191
    %277 = vst [vmem:[#allocation2 + $0x28] sm:$0xff] %v193
    %278 = vst [vmem:[#allocation2 + $0x30] sm:$0xff] %v268
    %279 = vst [vmem:[#allocation2 + $0x38] sm:$0xff] %v270
    %v280 = vld [vmem:[#allocation8] sm:$0xff]
    %v281 = vld [vmem:[#allocation8 + $0x8] sm:$0xff]
    %v282 = vld [vmem:[#allocation8 + $0x10] sm:$0xff]
    %v283 = vld [vmem:[#allocation8 + $0x18] sm:$0xff]
    %v284 = vld [vmem:[#allocation8 + $0x20] sm:$0xff]
    %v285 = vld [vmem:[#allocation8 + $0x28] sm:$0xff]
    %v286 = vld [vmem:[#allocation8 + $0x30] sm:$0xff]
    %v287 = vld [vmem:[#allocation8 + $0x38] sm:$0xff]
    %v288 = vld [vmem:[#allocation8 + $0x40] sm:$0xff]
    %v289 = vld [vmem:[#allocation8 + $0x48] sm:$0xff]
    %v290 = vld [vmem:[#allocation8 + $0x50] sm:$0xff]
    %v291 = vld [vmem:[#allocation8 + $0x58] sm:$0xff]
    %v292 = vld [vmem:[#allocation8 + $0x60] sm:$0xff]
    %v293 = vld [vmem:[#allocation8 + $0x68] sm:$0xff]
    %v294 = vld [vmem:[#allocation8 + $0x70] sm:$0xff]
    %v295 = vld [vmem:[#allocation8 + $0x78] sm:$0xff]
    %v296 = vld [vmem:[#allocation2] sm:$0x3]
    %v297 = vld [vmem:[#allocation2 + $0x8] sm:$0x3]
    %v298 = vld [vmem:[#allocation2 + $0x10] sm:$0x3]
    %v299 = vld [vmem:[#allocation2 + $0x18] sm:$0x3]
    %vm300 = vcmask 261120
    %v302 = vsel %vm300, 0.0, 0
    %304 = vmatprep.subr.mxu0 %v281
    %305 = vmatpush1.msra.mxu0 %v280
    %306 = vmatprep.subr.mxu0 %v285
    %307 = vmatpush1.msra.mxu0 %v284
    %308 = vmatprep.subr.mxu0 %v289
    %309 = vmatpush1.msra.mxu0 %v288
    %310 = vmatprep.subr.mxu0 %v293
    %311 = vmatpush1.msra.mxu0 %v292
    %312 = vmatprep.subr.mxu0 0.0
    %313 = vmatpush1.msra.mxu0 0.0
    %314 = vmatprep.subr.mxu0 0.0
    %315 = vmatpush1.msra.mxu0 0.0
    %316 = vmatprep.subr.mxu0 0.0
    %317 = vmatpush1.msra.mxu0 0.0
    %318 = vmatprep.subr.mxu0 0.0
    %319 = vmatpush1.msra.mxu0 0.0
    %320 = vmatprep.subr.mxu0 0.0
    %321 = vmatpush1.msra.mxu0 0.0
    %322 = vmatprep.subr.mxu0 0.0
    %323 = vmatpush1.msra.mxu0 0.0
    %324 = vmatprep.subr.mxu0 0.0
    %325 = vmatpush1.msra.mxu0 0.0
    %326 = vmatprep.subr.mxu0 0.0
    %327 = vmatpush1.msra.mxu0 0.0
    %328 = vmatprep.subr.mxu0 0.0
    %329 = vmatpush1.msra.mxu0 0.0
    %330 = vmatprep.subr.mxu0 0.0
    %331 = vmatpush1.msra.mxu0 0.0
    %332 = vmatprep.subr.mxu0 0.0
    %333 = vmatpush1.msra.mxu0 0.0
    %334 = vmatprep.subr.mxu0 0.0
    %335 = vmatpush1.msra.mxu0 0.0
    %336 = vmatprep.subr.mxu0 0.0
    %337 = vmatpush1.msra.mxu0 0.0
    %338 = vmatprep.subr.mxu0 0.0
    %339 = vmatpush1.msra.mxu0 0.0
    %340 = vmatprep.subr.mxu0 0.0
    %341 = vmatpush1.msra.mxu0 0.0
    %342 = vmatprep.subr.mxu0 0.0
    %343 = vmatpush1.msra.mxu0 0.0
    %344 = vmatprep.subr.mxu0 0.0
    %345 = vmatpush1.msra.mxu0 0.0
    %346 = vmatprep.subr.mxu0 0.0
    %347 = vmatpush1.msra.mxu0 0.0
    %348 = vmatprep.subr.mxu0 0.0
    %349 = vmatpush1.msra.mxu0 0.0
    %350 = vmatprep.subr.mxu0 0.0
    %351 = vmatpush1.msra.mxu0 0.0
    %352 = vmatprep.subr.mxu0 0.0
    %353 = vmatpush1.msra.mxu0 0.0
    %354 = vmatprep.subr.mxu0 0.0
    %355 = vmatpush1.msra.mxu0 0.0
    %356 = vmatprep.subr.mxu0 0.0
    %357 = vmatpush1.msra.mxu0 0.0
    %358 = vmatprep.subr.mxu0 0.0
    %359 = vmatpush1.msra.mxu0 0.0
    %360 = vmatprep.subr.mxu0 0.0
    %361 = vmatpush1.msra.mxu0 0.0
    %362 = vmatprep.subr.mxu0 0.0
    %363 = vmatpush1.msra.mxu0 0.0
    %364 = vmatprep.subr.mxu0 0.0
    %365 = vmatpush1.msra.mxu0 0.0
    %366 = vmatprep.subr.mxu0 0.0
    %367 = vmatpush1.msra.mxu0 0.0
    %368 = vmatprep.mubr.f32.mxu0 0.0
    %369 = vmatmul.mubr.f32.gmra.mrb[0].mxu0 %v302
    %v370 = vpop.f32.mrb[0].mxu0
    %v371 = vadd.f32 0.0, %v370
    %v372 = vpop.f32.mrb[0].mxu0
    %v373 = vadd.f32 0.0, %v372
    %374 = vdwg.mxu0
    %375 = vmatprep.subr.mxu0 %v283
    %376 = vmatpush1.msra.mxu0 %v282
    %377 = vmatprep.subr.mxu0 %v287
    %378 = vmatpush1.msra.mxu0 %v286
    %379 = vmatprep.subr.mxu0 %v291
    %380 = vmatpush1.msra.mxu0 %v290
    %381 = vmatprep.subr.mxu0 %v295
    %382 = vmatpush1.msra.mxu0 %v294
    %383 = vmatprep.subr.mxu0 0.0
    %384 = vmatpush1.msra.mxu0 0.0
    %385 = vmatprep.subr.mxu0 0.0
    %386 = vmatpush1.msra.mxu0 0.0
    %387 = vmatprep.subr.mxu0 0.0
    %388 = vmatpush1.msra.mxu0 0.0
    %389 = vmatprep.subr.mxu0 0.0
    %390 = vmatpush1.msra.mxu0 0.0
    %391 = vmatprep.subr.mxu0 0.0
    %392 = vmatpush1.msra.mxu0 0.0
    %393 = vmatprep.subr.mxu0 0.0
    %394 = vmatpush1.msra.mxu0 0.0
    %395 = vmatprep.subr.mxu0 0.0
    %396 = vmatpush1.msra.mxu0 0.0
    %397 = vmatprep.subr.mxu0 0.0
    %398 = vmatpush1.msra.mxu0 0.0
    %399 = vmatprep.subr.mxu0 0.0
    %400 = vmatpush1.msra.mxu0 0.0
    %401 = vmatprep.subr.mxu0 0.0
    %402 = vmatpush1.msra.mxu0 0.0
    %403 = vmatprep.subr.mxu0 0.0
    %404 = vmatpush1.msra.mxu0 0.0
    %405 = vmatprep.subr.mxu0 0.0
    %406 = vmatpush1.msra.mxu0 0.0
    %407 = vmatprep.subr.mxu0 0.0
    %408 = vmatpush1.msra.mxu0 0.0
    %409 = vmatprep.subr.mxu0 0.0
    %410 = vmatpush1.msra.mxu0 0.0
    %411 = vmatprep.subr.mxu0 0.0
    %412 = vmatpush1.msra.mxu0 0.0
    %413 = vmatprep.subr.mxu0 0.0
    %414 = vmatpush1.msra.mxu0 0.0
    %415 = vmatprep.subr.mxu0 0.0
    %416 = vmatpush1.msra.mxu0 0.0
    %417 = vmatprep.subr.mxu0 0.0
    %418 = vmatpush1.msra.mxu0 0.0
    %419 = vmatprep.subr.mxu0 0.0
    %420 = vmatpush1.msra.mxu0 0.0
    %421 = vmatprep.subr.mxu0 0.0
    %422 = vmatpush1.msra.mxu0 0.0
    %423 = vmatprep.subr.mxu0 0.0
    %424 = vmatpush1.msra.mxu0 0.0
    %425 = vmatprep.subr.mxu0 0.0
    %426 = vmatpush1.msra.mxu0 0.0
    %427 = vmatprep.subr.mxu0 0.0
    %428 = vmatpush1.msra.mxu0 0.0
    %429 = vmatprep.subr.mxu0 0.0
    %430 = vmatpush1.msra.mxu0 0.0
    %431 = vmatprep.subr.mxu0 0.0
    %432 = vmatpush1.msra.mxu0 0.0
    %433 = vmatprep.subr.mxu0 0.0
    %434 = vmatpush1.msra.mxu0 0.0
    %435 = vmatprep.subr.mxu0 0.0
    %436 = vmatpush1.msra.mxu0 0.0
    %437 = vmatprep.subr.mxu0 0.0
    %438 = vmatpush1.msra.mxu0 0.0
    %439 = vmatprep.mubr.f32.mxu0 0.0
    %440 = vmatmul.mubr.f32.gmra.mrb[0].mxu0 %v302
    %v441 = vpop.f32.mrb[0].mxu0
    %v442 = vadd.f32 0.0, %v441
    %v443 = vpop.f32.mrb[0].mxu0
    %v444 = vadd.f32 0.0, %v443
    %445 = vdwg.mxu0
    %v446 = vadd.f32 %v296, %v371
    %v447 = vadd.f32 %v297, %v373
    %v448 = vadd.f32 %v298, %v442
    %v449 = vadd.f32 %v299, %v444
    %v450 = vxor.u32 %v446, 2147483648
    %v451 = vmul.f32 %v450, 1.442695
    %v452 = vpow.pop %v451
    %v453 = vadd.f32 %v452, 1.0
    %v454 = vrcp.pop %v453
    %v455 = vmul.f32 1.0, %v454
    %v456 = vxor.u32 %v447, 2147483648
    %v457 = vmul.f32 %v456, 1.442695
    %v458 = vpow.pop %v457
    %v459 = vadd.f32 %v458, 1.0
    %v460 = vrcp.pop %v459
    %v461 = vmul.f32 1.0, %v460
    %v462 = vtanh.pop %v448
    %v463 = vxor.u32 %v449, 2147483648
    %v464 = vmul.f32 %v463, 1.442695
    %v465 = vpow.pop %v464
    %v466 = vadd.f32 %v465, 1.0
    %v467 = vrcp.pop %v466
    %v468 = vmul.f32 1.0, %v467
    %v469 = vmul.f32 %v461, 0.0
    %v470 = vmul.f32 %v455, %v462
    %v471 = vadd.f32 %v469, %v470
    %v472 = vtanh.pop %v471
    %v473 = vmul.f32 %v468, %v472
    %v474 = vld [vmem:[#allocation2] sm:$0xc]
    %v475 = vld [vmem:[#allocation2 + $0x8] sm:$0xc]
    %v476 = vld [vmem:[#allocation2 + $0x10] sm:$0xc]
    %v477 = vld [vmem:[#allocation2 + $0x18] sm:$0xc]
    %v479 = vsel %vm300, %v473, 0
    %481 = vmatprep.subr.mxu0 %v281
    %482 = vmatpush1.msra.mxu0 %v280
    %483 = vmatprep.subr.mxu0 %v285
    %484 = vmatpush1.msra.mxu0 %v284
    %485 = vmatprep.subr.mxu0 %v289
    %486 = vmatpush1.msra.mxu0 %v288
    %487 = vmatprep.subr.mxu0 %v293
    %488 = vmatpush1.msra.mxu0 %v292
    %489 = vmatprep.subr.mxu0 0.0
    %490 = vmatpush1.msra.mxu0 0.0
    %491 = vmatprep.subr.mxu0 0.0
    %492 = vmatpush1.msra.mxu0 0.0
    %493 = vmatprep.subr.mxu0 0.0
    %494 = vmatpush1.msra.mxu0 0.0
    %495 = vmatprep.subr.mxu0 0.0
    %496 = vmatpush1.msra.mxu0 0.0
    %497 = vmatprep.subr.mxu0 0.0
    %498 = vmatpush1.msra.mxu0 0.0
    %499 = vmatprep.subr.mxu0 0.0
    %500 = vmatpush1.msra.mxu0 0.0
    %501 = vmatprep.subr.mxu0 0.0
    %502 = vmatpush1.msra.mxu0 0.0
    %503 = vmatprep.subr.mxu0 0.0
    %504 = vmatpush1.msra.mxu0 0.0
    %505 = vmatprep.subr.mxu0 0.0
    %506 = vmatpush1.msra.mxu0 0.0
    %507 = vmatprep.subr.mxu0 0.0
    %508 = vmatpush1.msra.mxu0 0.0
    %509 = vmatprep.subr.mxu0 0.0
    %510 = vmatpush1.msra.mxu0 0.0
    %511 = vmatprep.subr.mxu0 0.0
    %512 = vmatpush1.msra.mxu0 0.0
    %513 = vmatprep.subr.mxu0 0.0
    %514 = vmatpush1.msra.mxu0 0.0
    %515 = vmatprep.subr.mxu0 0.0
    %516 = vmatpush1.msra.mxu0 0.0
    %517 = vmatprep.subr.mxu0 0.0
    %518 = vmatpush1.msra.mxu0 0.0
    %519 = vmatprep.subr.mxu0 0.0
    %520 = vmatpush1.msra.mxu0 0.0
    %521 = vmatprep.subr.mxu0 0.0
    %522 = vmatpush1.msra.mxu0 0.0
    %523 = vmatprep.subr.mxu0 0.0
    %524 = vmatpush1.msra.mxu0 0.0
    %525 = vmatprep.subr.mxu0 0.0
    %526 = vmatpush1.msra.mxu0 0.0
    %527 = vmatprep.subr.mxu0 0.0
    %528 = vmatpush1.msra.mxu0 0.0
    %529 = vmatprep.subr.mxu0 0.0
    %530 = vmatpush1.msra.mxu0 0.0
    %531 = vmatprep.subr.mxu0 0.0
    %532 = vmatpush1.msra.mxu0 0.0
    %533 = vmatprep.subr.mxu0 0.0
    %534 = vmatpush1.msra.mxu0 0.0
    %535 = vmatprep.subr.mxu0 0.0
    %536 = vmatpush1.msra.mxu0 0.0
    %537 = vmatprep.subr.mxu0 0.0
    %538 = vmatpush1.msra.mxu0 0.0
    %539 = vmatprep.subr.mxu0 0.0
    %540 = vmatpush1.msra.mxu0 0.0
    %541 = vmatprep.subr.mxu0 0.0
    %542 = vmatpush1.msra.mxu0 0.0
    %543 = vmatprep.subr.mxu0 0.0
    %544 = vmatpush1.msra.mxu0 0.0
    %545 = vmatprep.mubr.f32.mxu0 0.0
    %546 = vmatmul.mubr.f32.gmra.mrb[0].mxu0 %v479
    %v547 = vpop.f32.mrb[0].mxu0
    %v548 = vadd.f32 0.0, %v547
    %v549 = vpop.f32.mrb[0].mxu0
    %v550 = vadd.f32 0.0, %v549
    %551 = vdwg.mxu0
    %552 = vmatprep.subr.mxu0 %v283
    %553 = vmatpush1.msra.mxu0 %v282
    %554 = vmatprep.subr.mxu0 %v287
    %555 = vmatpush1.msra.mxu0 %v286
    %556 = vmatprep.subr.mxu0 %v291
    %557 = vmatpush1.msra.mxu0 %v290
    %558 = vmatprep.subr.mxu0 %v295
    %559 = vmatpush1.msra.mxu0 %v294
    %560 = vmatprep.subr.mxu0 0.0
    %561 = vmatpush1.msra.mxu0 0.0
    %562 = vmatprep.subr.mxu0 0.0
    %563 = vmatpush1.msra.mxu0 0.0
    %564 = vmatprep.subr.mxu0 0.0
    %565 = vmatpush1.msra.mxu0 0.0
    %566 = vmatprep.subr.mxu0 0.0
    %567 = vmatpush1.msra.mxu0 0.0
    %568 = vmatprep.subr.mxu0 0.0
    %569 = vmatpush1.msra.mxu0 0.0
    %570 = vmatprep.subr.mxu0 0.0
    %571 = vmatpush1.msra.mxu0 0.0
    %572 = vmatprep.subr.mxu0 0.0
    %573 = vmatpush1.msra.mxu0 0.0
    %574 = vmatprep.subr.mxu0 0.0
    %575 = vmatpush1.msra.mxu0 0.0
    %576 = vmatprep.subr.mxu0 0.0
    %577 = vmatpush1.msra.mxu0 0.0
    %578 = vmatprep.subr.mxu0 0.0
    %579 = vmatpush1.msra.mxu0 0.0
    %580 = vmatprep.subr.mxu0 0.0
    %581 = vmatpush1.msra.mxu0 0.0
    %582 = vmatprep.subr.mxu0 0.0
    %583 = vmatpush1.msra.mxu0 0.0
    %584 = vmatprep.subr.mxu0 0.0
    %585 = vmatpush1.msra.mxu0 0.0
    %586 = vmatprep.subr.mxu0 0.0
    %587 = vmatpush1.msra.mxu0 0.0
    %588 = vmatprep.subr.mxu0 0.0
    %589 = vmatpush1.msra.mxu0 0.0
    %590 = vmatprep.subr.mxu0 0.0
    %591 = vmatpush1.msra.mxu0 0.0
    %592 = vmatprep.subr.mxu0 0.0
    %593 = vmatpush1.msra.mxu0 0.0
    %594 = vmatprep.subr.mxu0 0.0
    %595 = vmatpush1.msra.mxu0 0.0
    %596 = vmatprep.subr.mxu0 0.0
    %597 = vmatpush1.msra.mxu0 0.0
    %598 = vmatprep.subr.mxu0 0.0
    %599 = vmatpush1.msra.mxu0 0.0
    %600 = vmatprep.subr.mxu0 0.0
    %601 = vmatpush1.msra.mxu0 0.0
    %602 = vmatprep.subr.mxu0 0.0
    %603 = vmatpush1.msra.mxu0 0.0
    %604 = vmatprep.subr.mxu0 0.0
    %605 = vmatpush1.msra.mxu0 0.0
    %606 = vmatprep.subr.mxu0 0.0
    %607 = vmatpush1.msra.mxu0 0.0
    %608 = vmatprep.subr.mxu0 0.0
    %609 = vmatpush1.msra.mxu0 0.0
    %610 = vmatprep.subr.mxu0 0.0
    %611 = vmatpush1.msra.mxu0 0.0
    %612 = vmatprep.subr.mxu0 0.0
    %613 = vmatpush1.msra.mxu0 0.0
    %614 = vmatprep.subr.mxu0 0.0
    %615 = vmatpush1.msra.mxu0 0.0
    %616 = vmatprep.mubr.f32.mxu0 0.0
    %617 = vmatmul.mubr.f32.gmra.mrb[0].mxu0 %v479
    %v618 = vpop.f32.mrb[0].mxu0
    %v619 = vadd.f32 0.0, %v618
    %v620 = vpop.f32.mrb[0].mxu0
    %v621 = vadd.f32 0.0, %v620
    %622 = vdwg.mxu0
    %v627 = vrot.slane %v548, 6
    %v628 = vrot.slane %v550, 6
    %v629 = vrot.slane %v619, 6
    %v630 = vrot.slane %v621, 6
    %v635 = vadd.f32 %v474, %v627
    %v636 = vadd.f32 %v475, %v628
    %v637 = vadd.f32 %v476, %v629
    %v638 = vadd.f32 %v477, %v630
    %v639 = vxor.u32 %v635, 2147483648
    %v640 = vmul.f32 %v639, 1.442695
    %v641 = vpow.pop %v640
    %v642 = vadd.f32 %v641, 1.0
    %v643 = vrcp.pop %v642
    %v644 = vmul.f32 1.0, %v643
    %v645 = vxor.u32 %v636, 2147483648
    %v646 = vmul.f32 %v645, 1.442695
    %v647 = vpow.pop %v646
    %v648 = vadd.f32 %v647, 1.0
    %v649 = vrcp.pop %v648
    %v650 = vmul.f32 1.0, %v649
    %v651 = vtanh.pop %v637
    %v652 = vxor.u32 %v638, 2147483648
    %v653 = vmul.f32 %v652, 1.442695
    %v654 = vpow.pop %v653
    %v655 = vadd.f32 %v654, 1.0
    %v656 = vrcp.pop %v655
    %v657 = vmul.f32 1.0, %v656
    %v659 = vrot.slane %v471, 6
    %v661 = vmul.f32 %v650, %v659
    %v662 = vmul.f32 %v644, %v651
    %v663 = vadd.f32 %v661, %v662
    %v664 = vtanh.pop %v663
    %v665 = vmul.f32 %v657, %v664
    %v666 = vld [vmem:[#allocation2] sm:$0x30]
    %v667 = vld [vmem:[#allocation2 + $0x8] sm:$0x30]
    %v668 = vld [vmem:[#allocation2 + $0x10] sm:$0x30]
    %v669 = vld [vmem:[#allocation2 + $0x18] sm:$0x30]
    %v671 = vrot.slane %v665, 2
    %v672 = vsel %vm300, %v671, 0
    %674 = vmatprep.subr.mxu0 %v281
    %675 = vmatpush1.msra.mxu0 %v280
    %676 = vmatprep.subr.mxu0 %v285
    %677 = vmatpush1.msra.mxu0 %v284
    %678 = vmatprep.subr.mxu0 %v289
    %679 = vmatpush1.msra.mxu0 %v288
    %680 = vmatprep.subr.mxu0 %v293
    %681 = vmatpush1.msra.mxu0 %v292
    %682 = vmatprep.subr.mxu0 0.0
    %683 = vmatpush1.msra.mxu0 0.0
    %684 = vmatprep.subr.mxu0 0.0
    %685 = vmatpush1.msra.mxu0 0.0
    %686 = vmatprep.subr.mxu0 0.0
    %687 = vmatpush1.msra.mxu0 0.0
    %688 = vmatprep.subr.mxu0 0.0
    %689 = vmatpush1.msra.mxu0 0.0
    %690 = vmatprep.subr.mxu0 0.0
    %691 = vmatpush1.msra.mxu0 0.0
    %692 = vmatprep.subr.mxu0 0.0
    %693 = vmatpush1.msra.mxu0 0.0
    %694 = vmatprep.subr.mxu0 0.0
    %695 = vmatpush1.msra.mxu0 0.0
    %696 = vmatprep.subr.mxu0 0.0
    %697 = vmatpush1.msra.mxu0 0.0
    %698 = vmatprep.subr.mxu0 0.0
    %699 = vmatpush1.msra.mxu0 0.0
    %700 = vmatprep.subr.mxu0 0.0
    %701 = vmatpush1.msra.mxu0 0.0
    %702 = vmatprep.subr.mxu0 0.0
    %703 = vmatpush1.msra.mxu0 0.0
    %704 = vmatprep.subr.mxu0 0.0
    %705 = vmatpush1.msra.mxu0 0.0
    %706 = vmatprep.subr.mxu0 0.0
    %707 = vmatpush1.msra.mxu0 0.0
    %708 = vmatprep.subr.mxu0 0.0
    %709 = vmatpush1.msra.mxu0 0.0
    %710 = vmatprep.subr.mxu0 0.0
    %711 = vmatpush1.msra.mxu0 0.0
    %712 = vmatprep.subr.mxu0 0.0
    %713 = vmatpush1.msra.mxu0 0.0
    %714 = vmatprep.subr.mxu0 0.0
    %715 = vmatpush1.msra.mxu0 0.0
    %716 = vmatprep.subr.mxu0 0.0
    %717 = vmatpush1.msra.mxu0 0.0
    %718 = vmatprep.subr.mxu0 0.0
    %719 = vmatpush1.msra.mxu0 0.0
    %720 = vmatprep.subr.mxu0 0.0
    %721 = vmatpush1.msra.mxu0 0.0
    %722 = vmatprep.subr.mxu0 0.0
    %723 = vmatpush1.msra.mxu0 0.0
    %724 = vmatprep.subr.mxu0 0.0
    %725 = vmatpush1.msra.mxu0 0.0
    %726 = vmatprep.subr.mxu0 0.0
    %727 = vmatpush1.msra.mxu0 0.0
    %728 = vmatprep.subr.mxu0 0.0
    %729 = vmatpush1.msra.mxu0 0.0
    %730 = vmatprep.subr.mxu0 0.0
    %731 = vmatpush1.msra.mxu0 0.0
    %732 = vmatprep.subr.mxu0 0.0
    %733 = vmatpush1.msra.mxu0 0.0
    %734 = vmatprep.subr.mxu0 0.0
    %735 = vmatpush1.msra.mxu0 0.0
    %736 = vmatprep.subr.mxu0 0.0
    %737 = vmatpush1.msra.mxu0 0.0
    %738 = vmatprep.mubr.f32.mxu0 0.0
    %739 = vmatmul.mubr.f32.gmra.mrb[0].mxu0 %v672
    %v740 = vpop.f32.mrb[0].mxu0
    %v741 = vadd.f32 0.0, %v740
    %v742 = vpop.f32.mrb[0].mxu0
    %v743 = vadd.f32 0.0, %v742
    %744 = vdwg.mxu0
    %745 = vmatprep.subr.mxu0 %v283
    %746 = vmatpush1.msra.mxu0 %v282
    %747 = vmatprep.subr.mxu0 %v287
    %748 = vmatpush1.msra.mxu0 %v286
    %749 = vmatprep.subr.mxu0 %v291
    %750 = vmatpush1.msra.mxu0 %v290
    %751 = vmatprep.subr.mxu0 %v295
    %752 = vmatpush1.msra.mxu0 %v294
    %753 = vmatprep.subr.mxu0 0.0
    %754 = vmatpush1.msra.mxu0 0.0
    %755 = vmatprep.subr.mxu0 0.0
    %756 = vmatpush1.msra.mxu0 0.0
    %757 = vmatprep.subr.mxu0 0.0
    %758 = vmatpush1.msra.mxu0 0.0
    %759 = vmatprep.subr.mxu0 0.0
    %760 = vmatpush1.msra.mxu0 0.0
    %761 = vmatprep.subr.mxu0 0.0
    %762 = vmatpush1.msra.mxu0 0.0
    %763 = vmatprep.subr.mxu0 0.0
    %764 = vmatpush1.msra.mxu0 0.0
    %765 = vmatprep.subr.mxu0 0.0
    %766 = vmatpush1.msra.mxu0 0.0
    %767 = vmatprep.subr.mxu0 0.0
    %768 = vmatpush1.msra.mxu0 0.0
    %769 = vmatprep.subr.mxu0 0.0
    %770 = vmatpush1.msra.mxu0 0.0
    %771 = vmatprep.subr.mxu0 0.0
    %772 = vmatpush1.msra.mxu0 0.0
    %773 = vmatprep.subr.mxu0 0.0
    %774 = vmatpush1.msra.mxu0 0.0
    %775 = vmatprep.subr.mxu0 0.0
    %776 = vmatpush1.msra.mxu0 0.0
    %777 = vmatprep.subr.mxu0 0.0
    %778 = vmatpush1.msra.mxu0 0.0
    %779 = vmatprep.subr.mxu0 0.0
    %780 = vmatpush1.msra.mxu0 0.0
    %781 = vmatprep.subr.mxu0 0.0
    %782 = vmatpush1.msra.mxu0 0.0
    %783 = vmatprep.subr.mxu0 0.0
    %784 = vmatpush1.msra.mxu0 0.0
    %785 = vmatprep.subr.mxu0 0.0
    %786 = vmatpush1.msra.mxu0 0.0
    %787 = vmatprep.subr.mxu0 0.0
    %788 = vmatpush1.msra.mxu0 0.0
    %789 = vmatprep.subr.mxu0 0.0
    %790 = vmatpush1.msra.mxu0 0.0
    %791 = vmatprep.subr.mxu0 0.0
    %792 = vmatpush1.msra.mxu0 0.0
    %793 = vmatprep.subr.mxu0 0.0
    %794 = vmatpush1.msra.mxu0 0.0
    %795 = vmatprep.subr.mxu0 0.0
    %796 = vmatpush1.msra.mxu0 0.0
    %797 = vmatprep.subr.mxu0 0.0
    %798 = vmatpush1.msra.mxu0 0.0
    %799 = vmatprep.subr.mxu0 0.0
    %800 = vmatpush1.msra.mxu0 0.0
    %801 = vmatprep.subr.mxu0 0.0
    %802 = vmatpush1.msra.mxu0 0.0
    %803 = vmatprep.subr.mxu0 0.0
    %804 = vmatpush1.msra.mxu0 0.0
    %805 = vmatprep.subr.mxu0 0.0
    %806 = vmatpush1.msra.mxu0 0.0
    %807 = vmatprep.subr.mxu0 0.0
    %808 = vmatpush1.msra.mxu0 0.0
    %809 = vmatprep.mubr.f32.mxu0 0.0
    %810 = vmatmul.mubr.f32.gmra.mrb[0].mxu0 %v672
    %v811 = vpop.f32.mrb[0].mxu0
    %v812 = vadd.f32 0.0, %v811
    %v813 = vpop.f32.mrb[0].mxu0
    %v814 = vadd.f32 0.0, %v813
    %815 = vdwg.mxu0
    %v820 = vrot.slane %v741, 4
    %v821 = vrot.slane %v743, 4
    %v822 = vrot.slane %v812, 4
    %v823 = vrot.slane %v814, 4
    %v828 = vadd.f32 %v666, %v820
    %v829 = vadd.f32 %v667, %v821
    %v830 = vadd.f32 %v668, %v822
    %v831 = vadd.f32 %v669, %v823
    %v832 = vxor.u32 %v828, 2147483648
    %v833 = vmul.f32 %v832, 1.442695
    %v834 = vpow.pop %v833
    %v835 = vadd.f32 %v834, 1.0
    %v836 = vrcp.pop %v835
    %v837 = vmul.f32 1.0, %v836
    %v838 = vxor.u32 %v829, 2147483648
    %v839 = vmul.f32 %v838, 1.442695
    %v840 = vpow.pop %v839
    %v841 = vadd.f32 %v840, 1.0
    %v842 = vrcp.pop %v841
    %v843 = vmul.f32 1.0, %v842
    %v844 = vtanh.pop %v830
    %v845 = vxor.u32 %v831, 2147483648
    %v846 = vmul.f32 %v845, 1.442695
    %v847 = vpow.pop %v846
    %v848 = vadd.f32 %v847, 1.0
    %v849 = vrcp.pop %v848
    %v850 = vmul.f32 1.0, %v849
    %v852 = vrot.slane %v663, 6
    %v854 = vmul.f32 %v843, %v852
    %v855 = vmul.f32 %v837, %v844
    %v856 = vadd.f32 %v854, %v855
    %v857 = vtanh.pop %v856
    %v858 = vmul.f32 %v850, %v857
    %v859 = vld [vmem:[#allocation2] sm:$0xc0]
    %v860 = vld [vmem:[#allocation2 + $0x8] sm:$0xc0]
    %v861 = vld [vmem:[#allocation2 + $0x10] sm:$0xc0]
    %v862 = vld [vmem:[#allocation2 + $0x18] sm:$0xc0]
    %v864 = vrot.slane %v858, 4
    %v865 = vsel %vm300, %v864, 0
    %867 = vmatprep.subr.mxu0 %v281
    %868 = vmatpush1.msra.mxu0 %v280
    %869 = vmatprep.subr.mxu0 %v285
    %870 = vmatpush1.msra.mxu0 %v284
    %871 = vmatprep.subr.mxu0 %v289
    %872 = vmatpush1.msra.mxu0 %v288
    %873 = vmatprep.subr.mxu0 %v293
    %874 = vmatpush1.msra.mxu0 %v292
    %875 = vmatprep.subr.mxu0 0.0
    %876 = vmatpush1.msra.mxu0 0.0
    %877 = vmatprep.subr.mxu0 0.0
    %878 = vmatpush1.msra.mxu0 0.0
    %879 = vmatprep.subr.mxu0 0.0
    %880 = vmatpush1.msra.mxu0 0.0
    %881 = vmatprep.subr.mxu0 0.0
    %882 = vmatpush1.msra.mxu0 0.0
    %883 = vmatprep.subr.mxu0 0.0
    %884 = vmatpush1.msra.mxu0 0.0
    %885 = vmatprep.subr.mxu0 0.0
    %886 = vmatpush1.msra.mxu0 0.0
    %887 = vmatprep.subr.mxu0 0.0
    %888 = vmatpush1.msra.mxu0 0.0
    %889 = vmatprep.subr.mxu0 0.0
    %890 = vmatpush1.msra.mxu0 0.0
    %891 = vmatprep.subr.mxu0 0.0
    %892 = vmatpush1.msra.mxu0 0.0
    %893 = vmatprep.subr.mxu0 0.0
    %894 = vmatpush1.msra.mxu0 0.0
    %895 = vmatprep.subr.mxu0 0.0
    %896 = vmatpush1.msra.mxu0 0.0
    %897 = vmatprep.subr.mxu0 0.0
    %898 = vmatpush1.msra.mxu0 0.0
    %899 = vmatprep.subr.mxu0 0.0
    %900 = vmatpush1.msra.mxu0 0.0
    %901 = vmatprep.subr.mxu0 0.0
    %902 = vmatpush1.msra.mxu0 0.0
    %903 = vmatprep.subr.mxu0 0.0
    %904 = vmatpush1.msra.mxu0 0.0
    %905 = vmatprep.subr.mxu0 0.0
    %906 = vmatpush1.msra.mxu0 0.0
    %907 = vmatprep.subr.mxu0 0.0
    %908 = vmatpush1.msra.mxu0 0.0
    %909 = vmatprep.subr.mxu0 0.0
    %910 = vmatpush1.msra.mxu0 0.0
    %911 = vmatprep.subr.mxu0 0.0
    %912 = vmatpush1.msra.mxu0 0.0
    %913 = vmatprep.subr.mxu0 0.0
    %914 = vmatpush1.msra.mxu0 0.0
    %915 = vmatprep.subr.mxu0 0.0
    %916 = vmatpush1.msra.mxu0 0.0
    %917 = vmatprep.subr.mxu0 0.0
    %918 = vmatpush1.msra.mxu0 0.0
    %919 = vmatprep.subr.mxu0 0.0
    %920 = vmatpush1.msra.mxu0 0.0
    %921 = vmatprep.subr.mxu0 0.0
    %922 = vmatpush1.msra.mxu0 0.0
    %923 = vmatprep.subr.mxu0 0.0
    %924 = vmatpush1.msra.mxu0 0.0
    %925 = vmatprep.subr.mxu0 0.0
    %926 = vmatpush1.msra.mxu0 0.0
    %927 = vmatprep.subr.mxu0 0.0
    %928 = vmatpush1.msra.mxu0 0.0
    %929 = vmatprep.subr.mxu0 0.0
    %930 = vmatpush1.msra.mxu0 0.0
    %931 = vmatprep.mubr.f32.mxu0 0.0
    %932 = vmatmul.mubr.f32.gmra.mrb[0].mxu0 %v865
    %v933 = vpop.f32.mrb[0].mxu0
    %v934 = vadd.f32 0.0, %v933
    %v935 = vpop.f32.mrb[0].mxu0
    %v936 = vadd.f32 0.0, %v935
    %937 = vdwg.mxu0
    %938 = vmatprep.subr.mxu0 %v283
    %939 = vmatpush1.msra.mxu0 %v282
    %940 = vmatprep.subr.mxu0 %v287
    %941 = vmatpush1.msra.mxu0 %v286
    %942 = vmatprep.subr.mxu0 %v291
    %943 = vmatpush1.msra.mxu0 %v290
    %944 = vmatprep.subr.mxu0 %v295
    %945 = vmatpush1.msra.mxu0 %v294
    %946 = vmatprep.subr.mxu0 0.0
    %947 = vmatpush1.msra.mxu0 0.0
    %948 = vmatprep.subr.mxu0 0.0
    %949 = vmatpush1.msra.mxu0 0.0
    %950 = vmatprep.subr.mxu0 0.0
    %951 = vmatpush1.msra.mxu0 0.0
    %952 = vmatprep.subr.mxu0 0.0
    %953 = vmatpush1.msra.mxu0 0.0
    %954 = vmatprep.subr.mxu0 0.0
    %955 = vmatpush1.msra.mxu0 0.0
    %956 = vmatprep.subr.mxu0 0.0
    %957 = vmatpush1.msra.mxu0 0.0
    %958 = vmatprep.subr.mxu0 0.0
    %959 = vmatpush1.msra.mxu0 0.0
    %960 = vmatprep.subr.mxu0 0.0
    %961 = vmatpush1.msra.mxu0 0.0
    %962 = vmatprep.subr.mxu0 0.0
    %963 = vmatpush1.msra.mxu0 0.0
    %964 = vmatprep.subr.mxu0 0.0
    %965 = vmatpush1.msra.mxu0 0.0
    %966 = vmatprep.subr.mxu0 0.0
    %967 = vmatpush1.msra.mxu0 0.0
    %968 = vmatprep.subr.mxu0 0.0
    %969 = vmatpush1.msra.mxu0 0.0
    %970 = vmatprep.subr.mxu0 0.0
    %971 = vmatpush1.msra.mxu0 0.0
    %972 = vmatprep.subr.mxu0 0.0
    %973 = vmatpush1.msra.mxu0 0.0
    %974 = vmatprep.subr.mxu0 0.0
    %975 = vmatpush1.msra.mxu0 0.0
    %976 = vmatprep.subr.mxu0 0.0
    %977 = vmatpush1.msra.mxu0 0.0
    %978 = vmatprep.subr.mxu0 0.0
    %979 = vmatpush1.msra.mxu0 0.0
    %980 = vmatprep.subr.mxu0 0.0
    %981 = vmatpush1.msra.mxu0 0.0
    %982 = vmatprep.subr.mxu0 0.0
    %983 = vmatpush1.msra.mxu0 0.0
    %984 = vmatprep.subr.mxu0 0.0
    %985 = vmatpush1.msra.mxu0 0.0
    %986 = vmatprep.subr.mxu0 0.0
    %987 = vmatpush1.msra.mxu0 0.0
    %988 = vmatprep.subr.mxu0 0.0
    %989 = vmatpush1.msra.mxu0 0.0
    %990 = vmatprep.subr.mxu0 0.0
    %991 = vmatpush1.msra.mxu0 0.0
    %992 = vmatprep.subr.mxu0 0.0
    %993 = vmatpush1.msra.mxu0 0.0
    %994 = vmatprep.subr.mxu0 0.0
    %995 = vmatpush1.msra.mxu0 0.0
    %996 = vmatprep.subr.mxu0 0.0
    %997 = vmatpush1.msra.mxu0 0.0
    %998 = vmatprep.subr.mxu0 0.0
    %999 = vmatpush1.msra.mxu0 0.0
    %1000 = vmatprep.subr.mxu0 0.0
    %1001 = vmatpush1.msra.mxu0 0.0
    %1002 = vmatprep.mubr.f32.mxu0 0.0
    %1003 = vmatmul.mubr.f32.gmra.mrb[0].mxu0 %v865
    %v1004 = vpop.f32.mrb[0].mxu0
    %v1005 = vadd.f32 0.0, %v1004
    %v1006 = vpop.f32.mrb[0].mxu0
    %v1007 = vadd.f32 0.0, %v1006
    %1008 = vdwg.mxu0
    %v1013 = vrot.slane %v934, 2
    %v1014 = vrot.slane %v936, 2
    %v1015 = vrot.slane %v1005, 2
    %v1016 = vrot.slane %v1007, 2
    %v1021 = vadd.f32 %v859, %v1013
    %v1022 = vadd.f32 %v860, %v1014
    %v1023 = vadd.f32 %v861, %v1015
    %v1024 = vadd.f32 %v862, %v1016
    %v1025 = vxor.u32 %v1021, 2147483648
    %v1026 = vmul.f32 %v1025, 1.442695
    %v1027 = vpow.pop %v1026
    %v1028 = vadd.f32 %v1027, 1.0
    %v1029 = vrcp.pop %v1028
    %v1030 = vmul.f32 1.0, %v1029
    %v1031 = vxor.u32 %v1022, 2147483648
    %v1032 = vmul.f32 %v1031, 1.442695
    %v1033 = vpow.pop %v1032
    %v1034 = vadd.f32 %v1033, 1.0
    %v1035 = vrcp.pop %v1034
    %v1036 = vmul.f32 1.0, %v1035
    %v1037 = vtanh.pop %v1023
    %v1038 = vxor.u32 %v1024, 2147483648
    %v1039 = vmul.f32 %v1038, 1.442695
    %v1040 = vpow.pop %v1039
    %v1041 = vadd.f32 %v1040, 1.0
    %v1042 = vrcp.pop %v1041
    %v1043 = vmul.f32 1.0, %v1042
    %v1045 = vrot.slane %v856, 6
    %v1047 = vmul.f32 %v1036, %v1045
    %v1048 = vmul.f32 %v1030, %v1037
    %v1049 = vadd.f32 %v1047, %v1048
    %v1050 = vtanh.pop %v1049
    %v1051 = vmul.f32 %v1043, %v1050
    %v1052 = vld [vmem:[#allocation2 + $0x20] sm:$0x3]
    %v1053 = vld [vmem:[#allocation2 + $0x28] sm:$0x3]
    %v1054 = vld [vmem:[#allocation2 + $0x30] sm:$0x3]
    %v1055 = vld [vmem:[#allocation2 + $0x38] sm:$0x3]
    %v1057 = vrot.slane %v1051, 6
    %v1058 = vsel %vm300, %v1057, 0
    %1060 = vmatprep.subr.mxu0 %v281
    %1061 = vmatpush1.msra.mxu0 %v280
    %1062 = vmatprep.subr.mxu0 %v285
    %1063 = vmatpush1.msra.mxu0 %v284
    %1064 = vmatprep.subr.mxu0 %v289
    %1065 = vmatpush1.msra.mxu0 %v288
    %1066 = vmatprep.subr.mxu0 %v293
    %1067 = vmatpush1.msra.mxu0 %v292
    %1068 = vmatprep.subr.mxu0 0.0
    %1069 = vmatpush1.msra.mxu0 0.0
    %1070 = vmatprep.subr.mxu0 0.0
    %1071 = vmatpush1.msra.mxu0 0.0
    %1072 = vmatprep.subr.mxu0 0.0
    %1073 = vmatpush1.msra.mxu0 0.0
    %1074 = vmatprep.subr.mxu0 0.0
    %1075 = vmatpush1.msra.mxu0 0.0
    %1076 = vmatprep.subr.mxu0 0.0
    %1077 = vmatpush1.msra.mxu0 0.0
    %1078 = vmatprep.subr.mxu0 0.0
    %1079 = vmatpush1.msra.mxu0 0.0
    %1080 = vmatprep.subr.mxu0 0.0
    %1081 = vmatpush1.msra.mxu0 0.0
    %1082 = vmatprep.subr.mxu0 0.0
    %1083 = vmatpush1.msra.mxu0 0.0
    %1084 = vmatprep.subr.mxu0 0.0
    %1085 = vmatpush1.msra.mxu0 0.0
    %1086 = vmatprep.subr.mxu0 0.0
    %1087 = vmatpush1.msra.mxu0 0.0
    %1088 = vmatprep.subr.mxu0 0.0
    %1089 = vmatpush1.msra.mxu0 0.0
    %1090 = vmatprep.subr.mxu0 0.0
    %1091 = vmatpush1.msra.mxu0 0.0
    %1092 = vmatprep.subr.mxu0 0.0
    %1093 = vmatpush1.msra.mxu0 0.0
    %1094 = vmatprep.subr.mxu0 0.0
    %1095 = vmatpush1.msra.mxu0 0.0
    %1096 = vmatprep.subr.mxu0 0.0
    %1097 = vmatpush1.msra.mxu0 0.0
    %1098 = vmatprep.subr.mxu0 0.0
    %1099 = vmatpush1.msra.mxu0 0.0
    %1100 = vmatprep.subr.mxu0 0.0
    %1101 = vmatpush1.msra.mxu0 0.0
    %1102 = vmatprep.subr.mxu0 0.0
    %1103 = vmatpush1.msra.mxu0 0.0
    %1104 = vmatprep.subr.mxu0 0.0
    %1105 = vmatpush1.msra.mxu0 0.0
    %1106 = vmatprep.subr.mxu0 0.0
    %1107 = vmatpush1.msra.mxu0 0.0
    %1108 = vmatprep.subr.mxu0 0.0
    %1109 = vmatpush1.msra.mxu0 0.0
    %1110 = vmatprep.subr.mxu0 0.0
    %1111 = vmatpush1.msra.mxu0 0.0
    %1112 = vmatprep.subr.mxu0 0.0
    %1113 = vmatpush1.msra.mxu0 0.0
    %1114 = vmatprep.subr.mxu0 0.0
    %1115 = vmatpush1.msra.mxu0 0.0
    %1116 = vmatprep.subr.mxu0 0.0
    %1117 = vmatpush1.msra.mxu0 0.0
    %1118 = vmatprep.subr.mxu0 0.0
    %1119 = vmatpush1.msra.mxu0 0.0
    %1120 = vmatprep.subr.mxu0 0.0
    %1121 = vmatpush1.msra.mxu0 0.0
    %1122 = vmatprep.subr.mxu0 0.0
    %1123 = vmatpush1.msra.mxu0 0.0
    %1124 = vmatprep.mubr.f32.mxu0 0.0
    %1125 = vmatmul.mubr.f32.gmra.mrb[0].mxu0 %v1058
    %v1126 = vpop.f32.mrb[0].mxu0
    %v1127 = vadd.f32 0.0, %v1126
    %v1128 = vpop.f32.mrb[0].mxu0
    %v1129 = vadd.f32 0.0, %v1128
    %1130 = vdwg.mxu0
    %1131 = vmatprep.subr.mxu0 %v283
    %1132 = vmatpush1.msra.mxu0 %v282
    %1133 = vmatprep.subr.mxu0 %v287
    %1134 = vmatpush1.msra.mxu0 %v286
    %1135 = vmatprep.subr.mxu0 %v291
    %1136 = vmatpush1.msra.mxu0 %v290
    %1137 = vmatprep.subr.mxu0 %v295
    %1138 = vmatpush1.msra.mxu0 %v294
    %1139 = vmatprep.subr.mxu0 0.0
    %1140 = vmatpush1.msra.mxu0 0.0
    %1141 = vmatprep.subr.mxu0 0.0
    %1142 = vmatpush1.msra.mxu0 0.0
    %1143 = vmatprep.subr.mxu0 0.0
    %1144 = vmatpush1.msra.mxu0 0.0
    %1145 = vmatprep.subr.mxu0 0.0
    %1146 = vmatpush1.msra.mxu0 0.0
    %1147 = vmatprep.subr.mxu0 0.0
    %1148 = vmatpush1.msra.mxu0 0.0
    %1149 = vmatprep.subr.mxu0 0.0
    %1150 = vmatpush1.msra.mxu0 0.0
    %1151 = vmatprep.subr.mxu0 0.0
    %1152 = vmatpush1.msra.mxu0 0.0
    %1153 = vmatprep.subr.mxu0 0.0
    %1154 = vmatpush1.msra.mxu0 0.0
    %1155 = vmatprep.subr.mxu0 0.0
    %1156 = vmatpush1.msra.mxu0 0.0
    %1157 = vmatprep.subr.mxu0 0.0
    %1158 = vmatpush1.msra.mxu0 0.0
    %1159 = vmatprep.subr.mxu0 0.0
    %1160 = vmatpush1.msra.mxu0 0.0
    %1161 = vmatprep.subr.mxu0 0.0
    %1162 = vmatpush1.msra.mxu0 0.0
    %1163 = vmatprep.subr.mxu0 0.0
    %1164 = vmatpush1.msra.mxu0 0.0
    %1165 = vmatprep.subr.mxu0 0.0
    %1166 = vmatpush1.msra.mxu0 0.0
    %1167 = vmatprep.subr.mxu0 0.0
    %1168 = vmatpush1.msra.mxu0 0.0
    %1169 = vmatprep.subr.mxu0 0.0
    %1170 = vmatpush1.msra.mxu0 0.0
    %1171 = vmatprep.subr.mxu0 0.0
    %1172 = vmatpush1.msra.mxu0 0.0
    %1173 = vmatprep.subr.mxu0 0.0
    %1174 = vmatpush1.msra.mxu0 0.0
    %1175 = vmatprep.subr.mxu0 0.0
    %1176 = vmatpush1.msra.mxu0 0.0
    %1177 = vmatprep.subr.mxu0 0.0
    %1178 = vmatpush1.msra.mxu0 0.0
    %1179 = vmatprep.subr.mxu0 0.0
    %1180 = vmatpush1.msra.mxu0 0.0
    %1181 = vmatprep.subr.mxu0 0.0
    %1182 = vmatpush1.msra.mxu0 0.0
    %1183 = vmatprep.subr.mxu0 0.0
    %1184 = vmatpush1.msra.mxu0 0.0
    %1185 = vmatprep.subr.mxu0 0.0
    %1186 = vmatpush1.msra.mxu0 0.0
    %1187 = vmatprep.subr.mxu0 0.0
    %1188 = vmatpush1.msra.mxu0 0.0
    %1189 = vmatprep.subr.mxu0 0.0
    %1190 = vmatpush1.msra.mxu0 0.0
    %1191 = vmatprep.subr.mxu0 0.0
    %1192 = vmatpush1.msra.mxu0 0.0
    %1193 = vmatprep.subr.mxu0 0.0
    %1194 = vmatpush1.msra.mxu0 0.0
    %1195 = vmatprep.mubr.f32.mxu0 0.0
    %1196 = vmatmul.mubr.f32.gmra.mrb[0].mxu0 %v1058
    %v1197 = vpop.f32.mrb[0].mxu0
    %v1198 = vadd.f32 0.0, %v1197
    %v1199 = vpop.f32.mrb[0].mxu0
    %v1200 = vadd.f32 0.0, %v1199
    %1201 = vdwg.mxu0
    %v1202 = vadd.f32 %v1052, %v1127
    %v1203 = vadd.f32 %v1053, %v1129
    %v1204 = vadd.f32 %v1054, %v1198
    %v1205 = vadd.f32 %v1055, %v1200
    %v1206 = vxor.u32 %v1202, 2147483648
    %v1207 = vmul.f32 %v1206, 1.442695
    %v1208 = vpow.pop %v1207
    %v1209 = vadd.f32 %v1208, 1.0
    %v1210 = vrcp.pop %v1209
    %v1211 = vmul.f32 1.0, %v1210
    %v1212 = vxor.u32 %v1203, 2147483648
    %v1213 = vmul.f32 %v1212, 1.442695
    %v1214 = vpow.pop %v1213
    %v1215 = vadd.f32 %v1214, 1.0
    %v1216 = vrcp.pop %v1215
    %v1217 = vmul.f32 1.0, %v1216
    %v1218 = vtanh.pop %v1204
    %v1219 = vxor.u32 %v1205, 2147483648
    %v1220 = vmul.f32 %v1219, 1.442695
    %v1221 = vpow.pop %v1220
    %v1222 = vadd.f32 %v1221, 1.0
    %v1223 = vrcp.pop %v1222
    %v1224 = vmul.f32 1.0, %v1223
    %v1226 = vrot.slane %v1049, 6
    %v1228 = vmul.f32 %v1217, %v1226
    %v1229 = vmul.f32 %v1211, %v1218
    %v1230 = vadd.f32 %v1228, %v1229
    %v1231 = vtanh.pop %v1230
    %v1232 = vmul.f32 %v1224, %v1231
    %v1233 = vld [vmem:[#allocation2 + $0x20] sm:$0xc]
    %v1234 = vld [vmem:[#allocation2 + $0x28] sm:$0xc]
    %v1235 = vld [vmem:[#allocation2 + $0x30] sm:$0xc]
    %v1236 = vld [vmem:[#allocation2 + $0x38] sm:$0xc]
    %v1238 = vsel %vm300, %v1232, 0
    %1240 = vmatprep.subr.mxu0 %v281
    %1241 = vmatpush1.msra.mxu0 %v280
    %1242 = vmatprep.subr.mxu0 %v285
    %1243 = vmatpush1.msra.mxu0 %v284
    %1244 = vmatprep.subr.mxu0 %v289
    %1245 = vmatpush1.msra.mxu0 %v288
    %1246 = vmatprep.subr.mxu0 %v293
    %1247 = vmatpush1.msra.mxu0 %v292
    %1248 = vmatprep.subr.mxu0 0.0
    %1249 = vmatpush1.msra.mxu0 0.0
    %1250 = vmatprep.subr.mxu0 0.0
    %1251 = vmatpush1.msra.mxu0 0.0
    %1252 = vmatprep.subr.mxu0 0.0
    %1253 = vmatpush1.msra.mxu0 0.0
    %1254 = vmatprep.subr.mxu0 0.0
    %1255 = vmatpush1.msra.mxu0 0.0
    %1256 = vmatprep.subr.mxu0 0.0
    %1257 = vmatpush1.msra.mxu0 0.0
    %1258 = vmatprep.subr.mxu0 0.0
    %1259 = vmatpush1.msra.mxu0 0.0
    %1260 = vmatprep.subr.mxu0 0.0
    %1261 = vmatpush1.msra.mxu0 0.0
    %1262 = vmatprep.subr.mxu0 0.0
    %1263 = vmatpush1.msra.mxu0 0.0
    %1264 = vmatprep.subr.mxu0 0.0
    %1265 = vmatpush1.msra.mxu0 0.0
    %1266 = vmatprep.subr.mxu0 0.0
    %1267 = vmatpush1.msra.mxu0 0.0
    %1268 = vmatprep.subr.mxu0 0.0
    %1269 = vmatpush1.msra.mxu0 0.0
    %1270 = vmatprep.subr.mxu0 0.0
    %1271 = vmatpush1.msra.mxu0 0.0
    %1272 = vmatprep.subr.mxu0 0.0
    %1273 = vmatpush1.msra.mxu0 0.0
    %1274 = vmatprep.subr.mxu0 0.0
    %1275 = vmatpush1.msra.mxu0 0.0
    %1276 = vmatprep.subr.mxu0 0.0
    %1277 = vmatpush1.msra.mxu0 0.0
    %1278 = vmatprep.subr.mxu0 0.0
    %1279 = vmatpush1.msra.mxu0 0.0
    %1280 = vmatprep.subr.mxu0 0.0
    %1281 = vmatpush1.msra.mxu0 0.0
    %1282 = vmatprep.subr.mxu0 0.0
    %1283 = vmatpush1.msra.mxu0 0.0
    %1284 = vmatprep.subr.mxu0 0.0
    %1285 = vmatpush1.msra.mxu0 0.0
    %1286 = vmatprep.subr.mxu0 0.0
    %1287 = vmatpush1.msra.mxu0 0.0
    %1288 = vmatprep.subr.mxu0 0.0
    %1289 = vmatpush1.msra.mxu0 0.0
    %1290 = vmatprep.subr.mxu0 0.0
    %1291 = vmatpush1.msra.mxu0 0.0
    %1292 = vmatprep.subr.mxu0 0.0
    %1293 = vmatpush1.msra.mxu0 0.0
    %1294 = vmatprep.subr.mxu0 0.0
    %1295 = vmatpush1.msra.mxu0 0.0
    %1296 = vmatprep.subr.mxu0 0.0
    %1297 = vmatpush1.msra.mxu0 0.0
    %1298 = vmatprep.subr.mxu0 0.0
    %1299 = vmatpush1.msra.mxu0 0.0
    %1300 = vmatprep.subr.mxu0 0.0
    %1301 = vmatpush1.msra.mxu0 0.0
    %1302 = vmatprep.subr.mxu0 0.0
    %1303 = vmatpush1.msra.mxu0 0.0
    %1304 = vmatprep.mubr.f32.mxu0 0.0
    %1305 = vmatmul.mubr.f32.gmra.mrb[0].mxu0 %v1238
    %v1306 = vpop.f32.mrb[0].mxu0
    %v1307 = vadd.f32 0.0, %v1306
    %v1308 = vpop.f32.mrb[0].mxu0
    %v1309 = vadd.f32 0.0, %v1308
    %1310 = vdwg.mxu0
    %1311 = vmatprep.subr.mxu0 %v283
    %1312 = vmatpush1.msra.mxu0 %v282
    %1313 = vmatprep.subr.mxu0 %v287
    %1314 = vmatpush1.msra.mxu0 %v286
    %1315 = vmatprep.subr.mxu0 %v291
    %1316 = vmatpush1.msra.mxu0 %v290
    %1317 = vmatprep.subr.mxu0 %v295
    %1318 = vmatpush1.msra.mxu0 %v294
    %1319 = vmatprep.subr.mxu0 0.0
    %1320 = vmatpush1.msra.mxu0 0.0
    %1321 = vmatprep.subr.mxu0 0.0
    %1322 = vmatpush1.msra.mxu0 0.0
    %1323 = vmatprep.subr.mxu0 0.0
    %1324 = vmatpush1.msra.mxu0 0.0
    %1325 = vmatprep.subr.mxu0 0.0
    %1326 = vmatpush1.msra.mxu0 0.0
    %1327 = vmatprep.subr.mxu0 0.0
    %1328 = vmatpush1.msra.mxu0 0.0
    %1329 = vmatprep.subr.mxu0 0.0
    %1330 = vmatpush1.msra.mxu0 0.0
    %1331 = vmatprep.subr.mxu0 0.0
    %1332 = vmatpush1.msra.mxu0 0.0
    %1333 = vmatprep.subr.mxu0 0.0
    %1334 = vmatpush1.msra.mxu0 0.0
    %1335 = vmatprep.subr.mxu0 0.0
    %1336 = vmatpush1.msra.mxu0 0.0
    %1337 = vmatprep.subr.mxu0 0.0
    %1338 = vmatpush1.msra.mxu0 0.0
    %1339 = vmatprep.subr.mxu0 0.0
    %1340 = vmatpush1.msra.mxu0 0.0
    %1341 = vmatprep.subr.mxu0 0.0
    %1342 = vmatpush1.msra.mxu0 0.0
    %1343 = vmatprep.subr.mxu0 0.0
    %1344 = vmatpush1.msra.mxu0 0.0
    %1345 = vmatprep.subr.mxu0 0.0
    %1346 = vmatpush1.msra.mxu0 0.0
    %1347 = vmatprep.subr.mxu0 0.0
    %1348 = vmatpush1.msra.mxu0 0.0
    %1349 = vmatprep.subr.mxu0 0.0
    %1350 = vmatpush1.msra.mxu0 0.0
    %1351 = vmatprep.subr.mxu0 0.0
    %1352 = vmatpush1.msra.mxu0 0.0
    %1353 = vmatprep.subr.mxu0 0.0
    %1354 = vmatpush1.msra.mxu0 0.0
    %1355 = vmatprep.subr.mxu0 0.0
    %1356 = vmatpush1.msra.mxu0 0.0
    %1357 = vmatprep.subr.mxu0 0.0
    %1358 = vmatpush1.msra.mxu0 0.0
    %1359 = vmatprep.subr.mxu0 0.0
    %1360 = vmatpush1.msra.mxu0 0.0
    %1361 = vmatprep.subr.mxu0 0.0
    %1362 = vmatpush1.msra.mxu0 0.0
    %1363 = vmatprep.subr.mxu0 0.0
    %1364 = vmatpush1.msra.mxu0 0.0
    %1365 = vmatprep.subr.mxu0 0.0
    %1366 = vmatpush1.msra.mxu0 0.0
    %1367 = vmatprep.subr.mxu0 0.0
    %1368 = vmatpush1.msra.mxu0 0.0
    %1369 = vmatprep.subr.mxu0 0.0
    %1370 = vmatpush1.msra.mxu0 0.0
    %1371 = vmatprep.subr.mxu0 0.0
    %1372 = vmatpush1.msra.mxu0 0.0
    %1373 = vmatprep.subr.mxu0 0.0
    %1374 = vmatpush1.msra.mxu0 0.0
    %1375 = vmatprep.mubr.f32.mxu0 0.0
    %1376 = vmatmul.mubr.f32.gmra.mrb[0].mxu0 %v1238
    %v1377 = vpop.f32.mrb[0].mxu0
    %v1378 = vadd.f32 0.0, %v1377
    %v1379 = vpop.f32.mrb[0].mxu0
    %v1380 = vadd.f32 0.0, %v1379
    %1381 = vdwg.mxu0
    %v1386 = vrot.slane %v1307, 6
    %v1387 = vrot.slane %v1309, 6
    %v1388 = vrot.slane %v1378, 6
    %v1389 = vrot.slane %v1380, 6
    %v1394 = vadd.f32 %v1233, %v1386
    %v1395 = vadd.f32 %v1234, %v1387
    %v1396 = vadd.f32 %v1235, %v1388
    %v1397 = vadd.f32 %v1236, %v1389
    %v1398 = vxor.u32 %v1394, 2147483648
    %v1399 = vmul.f32 %v1398, 1.442695
    %v1400 = vpow.pop %v1399
    %v1401 = vadd.f32 %v1400, 1.0
    %v1402 = vrcp.pop %v1401
    %v1403 = vmul.f32 1.0, %v1402
    %v1404 = vxor.u32 %v1395, 2147483648
    %v1405 = vmul.f32 %v1404, 1.442695
    %v1406 = vpow.pop %v1405
    %v1407 = vadd.f32 %v1406, 1.0
    %v1408 = vrcp.pop %v1407
    %v1409 = vmul.f32 1.0, %v1408
    %v1410 = vtanh.pop %v1396
    %v1411 = vxor.u32 %v1397, 2147483648
    %v1412 = vmul.f32 %v1411, 1.442695
    %v1413 = vpow.pop %v1412
    %v1414 = vadd.f32 %v1413, 1.0
    %v1415 = vrcp.pop %v1414
    %v1416 = vmul.f32 1.0, %v1415
    %v1418 = vrot.slane %v1230, 6
    %v1420 = vmul.f32 %v1409, %v1418
    %v1421 = vmul.f32 %v1403, %v1410
    %v1422 = vadd.f32 %v1420, %v1421
    %v1423 = vtanh.pop %v1422
    %v1424 = vmul.f32 %v1416, %v1423
    %v1425 = vld [vmem:[#allocation2 + $0x20] sm:$0x30]
    %v1426 = vld [vmem:[#allocation2 + $0x28] sm:$0x30]
    %v1427 = vld [vmem:[#allocation2 + $0x30] sm:$0x30]
    %v1428 = vld [vmem:[#allocation2 + $0x38] sm:$0x30]
    %v1430 = vrot.slane %v1424, 2
    %v1431 = vsel %vm300, %v1430, 0
    %1433 = vmatprep.subr.mxu0 %v281
    %1434 = vmatpush1.msra.mxu0 %v280
    %1435 = vmatprep.subr.mxu0 %v285
    %1436 = vmatpush1.msra.mxu0 %v284
    %1437 = vmatprep.subr.mxu0 %v289
    %1438 = vmatpush1.msra.mxu0 %v288
    %1439 = vmatprep.subr.mxu0 %v293
    %1440 = vmatpush1.msra.mxu0 %v292
    %1441 = vmatprep.subr.mxu0 0.0
    %1442 = vmatpush1.msra.mxu0 0.0
    %1443 = vmatprep.subr.mxu0 0.0
    %1444 = vmatpush1.msra.mxu0 0.0
    %1445 = vmatprep.subr.mxu0 0.0
    %1446 = vmatpush1.msra.mxu0 0.0
    %1447 = vmatprep.subr.mxu0 0.0
    %1448 = vmatpush1.msra.mxu0 0.0
    %1449 = vmatprep.subr.mxu0 0.0
    %1450 = vmatpush1.msra.mxu0 0.0
    %1451 = vmatprep.subr.mxu0 0.0
    %1452 = vmatpush1.msra.mxu0 0.0
    %1453 = vmatprep.subr.mxu0 0.0
    %1454 = vmatpush1.msra.mxu0 0.0
    %1455 = vmatprep.subr.mxu0 0.0
    %1456 = vmatpush1.msra.mxu0 0.0
    %1457 = vmatprep.subr.mxu0 0.0
    %1458 = vmatpush1.msra.mxu0 0.0
    %1459 = vmatprep.subr.mxu0 0.0
    %1460 = vmatpush1.msra.mxu0 0.0
    %1461 = vmatprep.subr.mxu0 0.0
    %1462 = vmatpush1.msra.mxu0 0.0
    %1463 = vmatprep.subr.mxu0 0.0
    %1464 = vmatpush1.msra.mxu0 0.0
    %1465 = vmatprep.subr.mxu0 0.0
    %1466 = vmatpush1.msra.mxu0 0.0
    %1467 = vmatprep.subr.mxu0 0.0
    %1468 = vmatpush1.msra.mxu0 0.0
    %1469 = vmatprep.subr.mxu0 0.0
    %1470 = vmatpush1.msra.mxu0 0.0
    %1471 = vmatprep.subr.mxu0 0.0
    %1472 = vmatpush1.msra.mxu0 0.0
    %1473 = vmatprep.subr.mxu0 0.0
    %1474 = vmatpush1.msra.mxu0 0.0
    %1475 = vmatprep.subr.mxu0 0.0
    %1476 = vmatpush1.msra.mxu0 0.0
    %1477 = vmatprep.subr.mxu0 0.0
    %1478 = vmatpush1.msra.mxu0 0.0
    %1479 = vmatprep.subr.mxu0 0.0
    %1480 = vmatpush1.msra.mxu0 0.0
    %1481 = vmatprep.subr.mxu0 0.0
    %1482 = vmatpush1.msra.mxu0 0.0
    %1483 = vmatprep.subr.mxu0 0.0
    %1484 = vmatpush1.msra.mxu0 0.0
    %1485 = vmatprep.subr.mxu0 0.0
    %1486 = vmatpush1.msra.mxu0 0.0
    %1487 = vmatprep.subr.mxu0 0.0
    %1488 = vmatpush1.msra.mxu0 0.0
    %1489 = vmatprep.subr.mxu0 0.0
    %1490 = vmatpush1.msra.mxu0 0.0
    %1491 = vmatprep.subr.mxu0 0.0
    %1492 = vmatpush1.msra.mxu0 0.0
    %1493 = vmatprep.subr.mxu0 0.0
    %1494 = vmatpush1.msra.mxu0 0.0
    %1495 = vmatprep.subr.mxu0 0.0
    %1496 = vmatpush1.msra.mxu0 0.0
    %1497 = vmatprep.mubr.f32.mxu0 0.0
    %1498 = vmatmul.mubr.f32.gmra.mrb[0].mxu0 %v1431
    %v1499 = vpop.f32.mrb[0].mxu0
    %v1500 = vadd.f32 0.0, %v1499
    %v1501 = vpop.f32.mrb[0].mxu0
    %v1502 = vadd.f32 0.0, %v1501
    %1503 = vdwg.mxu0
    %1504 = vmatprep.subr.mxu0 %v283
    %1505 = vmatpush1.msra.mxu0 %v282
    %1506 = vmatprep.subr.mxu0 %v287
    %1507 = vmatpush1.msra.mxu0 %v286
    %1508 = vmatprep.subr.mxu0 %v291
    %1509 = vmatpush1.msra.mxu0 %v290
    %1510 = vmatprep.subr.mxu0 %v295
    %1511 = vmatpush1.msra.mxu0 %v294
    %1512 = vmatprep.subr.mxu0 0.0
    %1513 = vmatpush1.msra.mxu0 0.0
    %1514 = vmatprep.subr.mxu0 0.0
    %1515 = vmatpush1.msra.mxu0 0.0
    %1516 = vmatprep.subr.mxu0 0.0
    %1517 = vmatpush1.msra.mxu0 0.0
    %1518 = vmatprep.subr.mxu0 0.0
    %1519 = vmatpush1.msra.mxu0 0.0
    %1520 = vmatprep.subr.mxu0 0.0
    %1521 = vmatpush1.msra.mxu0 0.0
    %1522 = vmatprep.subr.mxu0 0.0
    %1523 = vmatpush1.msra.mxu0 0.0
    %1524 = vmatprep.subr.mxu0 0.0
    %1525 = vmatpush1.msra.mxu0 0.0
    %1526 = vmatprep.subr.mxu0 0.0
    %1527 = vmatpush1.msra.mxu0 0.0
    %1528 = vmatprep.subr.mxu0 0.0
    %1529 = vmatpush1.msra.mxu0 0.0
    %1530 = vmatprep.subr.mxu0 0.0
    %1531 = vmatpush1.msra.mxu0 0.0
    %1532 = vmatprep.subr.mxu0 0.0
    %1533 = vmatpush1.msra.mxu0 0.0
    %1534 = vmatprep.subr.mxu0 0.0
    %1535 = vmatpush1.msra.mxu0 0.0
    %1536 = vmatprep.subr.mxu0 0.0
    %1537 = vmatpush1.msra.mxu0 0.0
    %1538 = vmatprep.subr.mxu0 0.0
    %1539 = vmatpush1.msra.mxu0 0.0
    %1540 = vmatprep.subr.mxu0 0.0
    %1541 = vmatpush1.msra.mxu0 0.0
    %1542 = vmatprep.subr.mxu0 0.0
    %1543 = vmatpush1.msra.mxu0 0.0
    %1544 = vmatprep.subr.mxu0 0.0
    %1545 = vmatpush1.msra.mxu0 0.0
    %1546 = vmatprep.subr.mxu0 0.0
    %1547 = vmatpush1.msra.mxu0 0.0
    %1548 = vmatprep.subr.mxu0 0.0
    %1549 = vmatpush1.msra.mxu0 0.0
    %1550 = vmatprep.subr.mxu0 0.0
    %1551 = vmatpush1.msra.mxu0 0.0
    %1552 = vmatprep.subr.mxu0 0.0
    %1553 = vmatpush1.msra.mxu0 0.0
    %1554 = vmatprep.subr.mxu0 0.0
    %1555 = vmatpush1.msra.mxu0 0.0
    %1556 = vmatprep.subr.mxu0 0.0
    %1557 = vmatpush1.msra.mxu0 0.0
    %1558 = vmatprep.subr.mxu0 0.0
    %1559 = vmatpush1.msra.mxu0 0.0
    %1560 = vmatprep.subr.mxu0 0.0
    %1561 = vmatpush1.msra.mxu0 0.0
    %1562 = vmatprep.subr.mxu0 0.0
    %1563 = vmatpush1.msra.mxu0 0.0
    %1564 = vmatprep.subr.mxu0 0.0
    %1565 = vmatpush1.msra.mxu0 0.0
    %1566 = vmatprep.subr.mxu0 0.0
    %1567 = vmatpush1.msra.mxu0 0.0
    %1568 = vmatprep.mubr.f32.mxu0 0.0
    %1569 = vmatmul.mubr.f32.gmra.mrb[0].mxu0 %v1431
    %v1570 = vpop.f32.mrb[0].mxu0
    %v1571 = vadd.f32 0.0, %v1570
    %v1572 = vpop.f32.mrb[0].mxu0
    %v1573 = vadd.f32 0.0, %v1572
    %1574 = vdwg.mxu0
    %v1579 = vrot.slane %v1500, 4
    %v1580 = vrot.slane %v1502, 4
    %v1581 = vrot.slane %v1571, 4
    %v1582 = vrot.slane %v1573, 4
    %v1587 = vadd.f32 %v1425, %v1579
    %v1588 = vadd.f32 %v1426, %v1580
    %v1589 = vadd.f32 %v1427, %v1581
    %v1590 = vadd.f32 %v1428, %v1582
    %v1591 = vxor.u32 %v1587, 2147483648
    %v1592 = vmul.f32 %v1591, 1.442695
    %v1593 = vpow.pop %v1592
    %v1594 = vadd.f32 %v1593, 1.0
    %v1595 = vrcp.pop %v1594
    %v1596 = vmul.f32 1.0, %v1595
    %v1597 = vxor.u32 %v1588, 2147483648
    %v1598 = vmul.f32 %v1597, 1.442695
    %v1599 = vpow.pop %v1598
    %v1600 = vadd.f32 %v1599, 1.0
    %v1601 = vrcp.pop %v1600
    %v1602 = vmul.f32 1.0, %v1601
    %v1603 = vtanh.pop %v1589
    %v1604 = vxor.u32 %v1590, 2147483648
    %v1605 = vmul.f32 %v1604, 1.442695
    %v1606 = vpow.pop %v1605
    %v1607 = vadd.f32 %v1606, 1.0
    %v1608 = vrcp.pop %v1607
    %v1609 = vmul.f32 1.0, %v1608
    %v1611 = vrot.slane %v1422, 6
    %v1613 = vmul.f32 %v1602, %v1611
    %v1614 = vmul.f32 %v1596, %v1603
    %v1615 = vadd.f32 %v1613, %v1614
    %v1616 = vtanh.pop %v1615
    %v1617 = vmul.f32 %v1609, %v1616
    %v1618 = vld [vmem:[#allocation2 + $0x20] sm:$0xc0]
    %v1619 = vld [vmem:[#allocation2 + $0x28] sm:$0xc0]
    %v1620 = vld [vmem:[#allocation2 + $0x30] sm:$0xc0]
    %v1621 = vld [vmem:[#allocation2 + $0x38] sm:$0xc0]
    %v1623 = vrot.slane %v1617, 4
    %v1624 = vsel %vm300, %v1623, 0
    %1626 = vmatprep.subr.mxu0 %v281
    %1627 = vmatpush1.msra.mxu0 %v280
    %1628 = vmatprep.subr.mxu0 %v285
    %1629 = vmatpush1.msra.mxu0 %v284
    %1630 = vmatprep.subr.mxu0 %v289
    %1631 = vmatpush1.msra.mxu0 %v288
    %1632 = vmatprep.subr.mxu0 %v293
    %1633 = vmatpush1.msra.mxu0 %v292
    %1634 = vmatprep.subr.mxu0 0.0
    %1635 = vmatpush1.msra.mxu0 0.0
    %1636 = vmatprep.subr.mxu0 0.0
    %1637 = vmatpush1.msra.mxu0 0.0
    %1638 = vmatprep.subr.mxu0 0.0
    %1639 = vmatpush1.msra.mxu0 0.0
    %1640 = vmatprep.subr.mxu0 0.0
    %1641 = vmatpush1.msra.mxu0 0.0
    %1642 = vmatprep.subr.mxu0 0.0
    %1643 = vmatpush1.msra.mxu0 0.0
    %1644 = vmatprep.subr.mxu0 0.0
    %1645 = vmatpush1.msra.mxu0 0.0
    %1646 = vmatprep.subr.mxu0 0.0
    %1647 = vmatpush1.msra.mxu0 0.0
    %1648 = vmatprep.subr.mxu0 0.0
    %1649 = vmatpush1.msra.mxu0 0.0
    %1650 = vmatprep.subr.mxu0 0.0
    %1651 = vmatpush1.msra.mxu0 0.0
    %1652 = vmatprep.subr.mxu0 0.0
    %1653 = vmatpush1.msra.mxu0 0.0
    %1654 = vmatprep.subr.mxu0 0.0
    %1655 = vmatpush1.msra.mxu0 0.0
    %1656 = vmatprep.subr.mxu0 0.0
    %1657 = vmatpush1.msra.mxu0 0.0
    %1658 = vmatprep.subr.mxu0 0.0
    %1659 = vmatpush1.msra.mxu0 0.0
    %1660 = vmatprep.subr.mxu0 0.0
    %1661 = vmatpush1.msra.mxu0 0.0
    %1662 = vmatprep.subr.mxu0 0.0
    %1663 = vmatpush1.msra.mxu0 0.0
    %1664 = vmatprep.subr.mxu0 0.0
    %1665 = vmatpush1.msra.mxu0 0.0
    %1666 = vmatprep.subr.mxu0 0.0
    %1667 = vmatpush1.msra.mxu0 0.0
    %1668 = vmatprep.subr.mxu0 0.0
    %1669 = vmatpush1.msra.mxu0 0.0
    %1670 = vmatprep.subr.mxu0 0.0
    %1671 = vmatpush1.msra.mxu0 0.0
    %1672 = vmatprep.subr.mxu0 0.0
    %1673 = vmatpush1.msra.mxu0 0.0
    %1674 = vmatprep.subr.mxu0 0.0
    %1675 = vmatpush1.msra.mxu0 0.0
    %1676 = vmatprep.subr.mxu0 0.0
    %1677 = vmatpush1.msra.mxu0 0.0
    %1678 = vmatprep.subr.mxu0 0.0
    %1679 = vmatpush1.msra.mxu0 0.0
    %1680 = vmatprep.subr.mxu0 0.0
    %1681 = vmatpush1.msra.mxu0 0.0
    %1682 = vmatprep.subr.mxu0 0.0
    %1683 = vmatpush1.msra.mxu0 0.0
    %1684 = vmatprep.subr.mxu0 0.0
    %1685 = vmatpush1.msra.mxu0 0.0
    %1686 = vmatprep.subr.mxu0 0.0
    %1687 = vmatpush1.msra.mxu0 0.0
    %1688 = vmatprep.subr.mxu0 0.0
    %1689 = vmatpush1.msra.mxu0 0.0
    %1690 = vmatprep.mubr.f32.mxu0 0.0
    %1691 = vmatmul.mubr.f32.gmra.mrb[0].mxu0 %v1624
    %v1692 = vpop.f32.mrb[0].mxu0
    %v1693 = vadd.f32 0.0, %v1692
    %v1694 = vpop.f32.mrb[0].mxu0
    %v1695 = vadd.f32 0.0, %v1694
    %1696 = vdwg.mxu0
    %1697 = vmatprep.subr.mxu0 %v283
    %1698 = vmatpush1.msra.mxu0 %v282
    %1699 = vmatprep.subr.mxu0 %v287
    %1700 = vmatpush1.msra.mxu0 %v286
    %1701 = vmatprep.subr.mxu0 %v291
    %1702 = vmatpush1.msra.mxu0 %v290
    %1703 = vmatprep.subr.mxu0 %v295
    %1704 = vmatpush1.msra.mxu0 %v294
    %1705 = vmatprep.subr.mxu0 0.0
    %1706 = vmatpush1.msra.mxu0 0.0
    %1707 = vmatprep.subr.mxu0 0.0
    %1708 = vmatpush1.msra.mxu0 0.0
    %1709 = vmatprep.subr.mxu0 0.0
    %1710 = vmatpush1.msra.mxu0 0.0
    %1711 = vmatprep.subr.mxu0 0.0
    %1712 = vmatpush1.msra.mxu0 0.0
    %1713 = vmatprep.subr.mxu0 0.0
    %1714 = vmatpush1.msra.mxu0 0.0
    %1715 = vmatprep.subr.mxu0 0.0
    %1716 = vmatpush1.msra.mxu0 0.0
    %1717 = vmatprep.subr.mxu0 0.0
    %1718 = vmatpush1.msra.mxu0 0.0
    %1719 = vmatprep.subr.mxu0 0.0
    %1720 = vmatpush1.msra.mxu0 0.0
    %1721 = vmatprep.subr.mxu0 0.0
    %1722 = vmatpush1.msra.mxu0 0.0
    %1723 = vmatprep.subr.mxu0 0.0
    %1724 = vmatpush1.msra.mxu0 0.0
    %1725 = vmatprep.subr.mxu0 0.0
    %1726 = vmatpush1.msra.mxu0 0.0
    %1727 = vmatprep.subr.mxu0 0.0
    %1728 = vmatpush1.msra.mxu0 0.0
    %1729 = vmatprep.subr.mxu0 0.0
    %1730 = vmatpush1.msra.mxu0 0.0
    %1731 = vmatprep.subr.mxu0 0.0
    %1732 = vmatpush1.msra.mxu0 0.0
    %1733 = vmatprep.subr.mxu0 0.0
    %1734 = vmatpush1.msra.mxu0 0.0
    %1735 = vmatprep.subr.mxu0 0.0
    %1736 = vmatpush1.msra.mxu0 0.0
    %1737 = vmatprep.subr.mxu0 0.0
    %1738 = vmatpush1.msra.mxu0 0.0
    %1739 = vmatprep.subr.mxu0 0.0
    %1740 = vmatpush1.msra.mxu0 0.0
    %1741 = vmatprep.subr.mxu0 0.0
    %1742 = vmatpush1.msra.mxu0 0.0
    %1743 = vmatprep.subr.mxu0 0.0
    %1744 = vmatpush1.msra.mxu0 0.0
    %1745 = vmatprep.subr.mxu0 0.0
    %1746 = vmatpush1.msra.mxu0 0.0
    %1747 = vmatprep.subr.mxu0 0.0
    %1748 = vmatpush1.msra.mxu0 0.0
    %1749 = vmatprep.subr.mxu0 0.0
    %1750 = vmatpush1.msra.mxu0 0.0
    %1751 = vmatprep.subr.mxu0 0.0
    %1752 = vmatpush1.msra.mxu0 0.0
    %1753 = vmatprep.subr.mxu0 0.0
    %1754 = vmatpush1.msra.mxu0 0.0
    %1755 = vmatprep.subr.mxu0 0.0
    %1756 = vmatpush1.msra.mxu0 0.0
    %1757 = vmatprep.subr.mxu0 0.0
    %1758 = vmatpush1.msra.mxu0 0.0
    %1759 = vmatprep.subr.mxu0 0.0
    %1760 = vmatpush1.msra.mxu0 0.0
    %1761 = vmatprep.mubr.f32.mxu0 0.0
    %1762 = vmatmul.mubr.f32.gmra.mrb[0].mxu0 %v1624
    %v1763 = vpop.f32.mrb[0].mxu0
    %v1764 = vadd.f32 0.0, %v1763
    %v1765 = vpop.f32.mrb[0].mxu0
    %v1766 = vadd.f32 0.0, %v1765
    %1767 = vdwg.mxu0
    %v1772 = vrot.slane %v1693, 2
    %v1773 = vrot.slane %v1695, 2
    %v1774 = vrot.slane %v1764, 2
    %v1775 = vrot.slane %v1766, 2
    %v1780 = vadd.f32 %v1618, %v1772
    %v1781 = vadd.f32 %v1619, %v1773
    %v1782 = vadd.f32 %v1620, %v1774
    %v1783 = vadd.f32 %v1621, %v1775
    %v1784 = vxor.u32 %v1780, 2147483648
    %v1785 = vmul.f32 %v1784, 1.442695
    %v1786 = vpow.pop %v1785
    %v1787 = vadd.f32 %v1786, 1.0
    %v1788 = vrcp.pop %v1787
    %v1789 = vmul.f32 1.0, %v1788
    %v1790 = vxor.u32 %v1781, 2147483648
    %v1791 = vmul.f32 %v1790, 1.442695
    %v1792 = vpow.pop %v1791
    %v1793 = vadd.f32 %v1792, 1.0
    %v1794 = vrcp.pop %v1793
    %v1795 = vmul.f32 1.0, %v1794
    %v1796 = vtanh.pop %v1782
    %v1797 = vxor.u32 %v1783, 2147483648
    %v1798 = vmul.f32 %v1797, 1.442695
    %v1799 = vpow.pop %v1798
    %v1800 = vadd.f32 %v1799, 1.0
    %v1801 = vrcp.pop %v1800
    %v1802 = vmul.f32 1.0, %v1801
    %v1804 = vrot.slane %v1615, 6
    %v1806 = vmul.f32 %v1795, %v1804
    %v1807 = vmul.f32 %v1789, %v1796
    %v1808 = vadd.f32 %v1806, %v1807
    %v1809 = vtanh.pop %v1808
    %v1810 = vmul.f32 %v1802, %v1809
    %v1811 = vld [vmem:[#allocation9] sm:$0xff]
    %v1812 = vld [vmem:[#allocation9 + $0x8] sm:$0xff]
    %v1813 = vld [vmem:[#allocation9 + $0x10] sm:$0xff]
    %v1814 = vld [vmem:[#allocation9 + $0x18] sm:$0xff]
    %v1815 = vld [vmem:[%s5] sm:$0x1]
    %v1817 = vlaneseq
    %v1818 = vshrl.u32 %v1817, 7
    %v1819 = vsub.s32 0, %v1818
    %v1820 = vrot.slane %v1815, %v1819
    %v1823 = vrot.slane %v1810, 6
    %v1824 = vsel %vm300, %v1823, 0
    %1826 = vmatprep.subr.mxu0 0.0
    %1827 = vmatpush1.msra.mxu0 %v1811
    %1828 = vmatprep.subr.mxu0 0.0
    %1829 = vmatpush1.msra.mxu0 %v1812
    %1830 = vmatprep.subr.mxu0 0.0
    %1831 = vmatpush1.msra.mxu0 %v1813
    %1832 = vmatprep.subr.mxu0 0.0
    %1833 = vmatpush1.msra.mxu0 %v1814
    %1834 = vmatprep.subr.mxu0 0.0
    %1835 = vmatpush1.msra.mxu0 0.0
    %1836 = vmatprep.subr.mxu0 0.0
    %1837 = vmatpush1.msra.mxu0 0.0
    %1838 = vmatprep.subr.mxu0 0.0
    %1839 = vmatpush1.msra.mxu0 0.0
    %1840 = vmatprep.subr.mxu0 0.0
    %1841 = vmatpush1.msra.mxu0 0.0
    %1842 = vmatprep.subr.mxu0 0.0
    %1843 = vmatpush1.msra.mxu0 0.0
    %1844 = vmatprep.subr.mxu0 0.0
    %1845 = vmatpush1.msra.mxu0 0.0
    %1846 = vmatprep.subr.mxu0 0.0
    %1847 = vmatpush1.msra.mxu0 0.0
    %1848 = vmatprep.subr.mxu0 0.0
    %1849 = vmatpush1.msra.mxu0 0.0
    %1850 = vmatprep.subr.mxu0 0.0
    %1851 = vmatpush1.msra.mxu0 0.0
    %1852 = vmatprep.subr.mxu0 0.0
    %1853 = vmatpush1.msra.mxu0 0.0
    %1854 = vmatprep.subr.mxu0 0.0
    %1855 = vmatpush1.msra.mxu0 0.0
    %1856 = vmatprep.subr.mxu0 0.0
    %1857 = vmatpush1.msra.mxu0 0.0
    %1858 = vmatprep.subr.mxu0 0.0
    %1859 = vmatpush1.msra.mxu0 0.0
    %1860 = vmatprep.subr.mxu0 0.0
    %1861 = vmatpush1.msra.mxu0 0.0
    %1862 = vmatprep.subr.mxu0 0.0
    %1863 = vmatpush1.msra.mxu0 0.0
    %1864 = vmatprep.subr.mxu0 0.0
    %1865 = vmatpush1.msra.mxu0 0.0
    %1866 = vmatprep.subr.mxu0 0.0
    %1867 = vmatpush1.msra.mxu0 0.0
    %1868 = vmatprep.subr.mxu0 0.0
    %1869 = vmatpush1.msra.mxu0 0.0
    %1870 = vmatprep.subr.mxu0 0.0
    %1871 = vmatpush1.msra.mxu0 0.0
    %1872 = vmatprep.subr.mxu0 0.0
    %1873 = vmatpush1.msra.mxu0 0.0
    %1874 = vmatprep.subr.mxu0 0.0
    %1875 = vmatpush1.msra.mxu0 0.0
    %1876 = vmatprep.subr.mxu0 0.0
    %1877 = vmatpush1.msra.mxu0 0.0
    %1878 = vmatprep.subr.mxu0 0.0
    %1879 = vmatpush1.msra.mxu0 0.0
    %1880 = vmatprep.subr.mxu0 0.0
    %1881 = vmatpush1.msra.mxu0 0.0
    %1882 = vmatprep.subr.mxu0 0.0
    %1883 = vmatpush1.msra.mxu0 0.0
    %1884 = vmatprep.subr.mxu0 0.0
    %1885 = vmatpush1.msra.mxu0 0.0
    %1886 = vmatprep.subr.mxu0 0.0
    %1887 = vmatpush1.msra.mxu0 0.0
    %1888 = vmatprep.subr.mxu0 0.0
    %1889 = vmatpush1.msra.mxu0 0.0
    %1890 = vmatprep.mubr.f32.mxu0 0.0
    %1891 = vmatmul.mubr.f32.gmra.mrb[0].mxu0 %v1824
    %v1892 = vpop.f32.mrb[0].mxu0
    %v1893 = vadd.f32 %v1820, %v1892
    %v1894 = vpop.f32.mrb[0].mxu0
    %1895 = vdwg.mxu0
    %1896 = vst [vmem:[#allocation11] sm:$0x3] %v1893
    // Predicated region
    $region42: #{tpu_custom_call.1} parent=1 // pred_check
      _
    $region43: #{tpu_custom_call.1} parent=1 // pred_check_branch
      %1898 = sbr.rel (0) target = $region45
    $region44: #{tpu_custom_call.1} parent=1 // pred_region
      %s1900 = ssub.s32 32, 32
      %1901 = vsyncadd [#allocation5], %s1900
      %s1903 = sshll.u32 [#allocation11], 4
      %s1904 = int_to_ptr.vmem [resolvable:$true] %s1903
      %1906 = dma.vmem_to_hbm [thread:$0]  %s1904, 32, %s6, [#allocation5]
    $region45: #{tpu_custom_call.1} parent=1 // pred_fallthru
      _
    // Predicated region
    $region46: #{tpu_custom_call.1} parent=1 // pred_check
      _
    $region47: #{tpu_custom_call.1} parent=1 // pred_check_branch
      %1908 = sbr.rel (0) target = $region49
    $region48: #{tpu_custom_call.1} parent=1 // pred_region
      %1909 = dma.done [#allocation5], 32
    $region49: #{tpu_custom_call.1} parent=1 // pred_fallthru
      _
    %1910 = vsyncpa [#allocation4], 1
    %1911 = vsyncpa [#allocation7], 1
    %1912 = vsyncpa [#allocation10], 1
    %1913 = vsyncpa [#allocation5], 1

</llo_original>
